<compile_context>
chip_gen: v6e
topology: v6e:2x2x1
jax: 0.10.0
libtpu: 0.0.40
codegen_flags: <defaults>
</compile_context>

<pallas_src>
import math
import functools

import jax
import jax.numpy as jnp
from jax import lax
from jax.experimental import pallas as pl
from jax.experimental.pallas import tpu as pltpu


# ----------------------------- in-kernel helpers -----------------------------

def _rmsnorm(x, w, eps):
    # x: (S, D) f32, w: (1, D) f32
    ms = jnp.mean(x * x, axis=-1, keepdims=True)
    return (x * lax.rsqrt(ms + eps)) * w


def _rotary(x, cos, sin_a, sin_b):
    # Interleaved-pair rotary via lane rolls + sign-masked sin tables:
    #   out[2i]   = x[2i]*cos_i - x[2i+1]*sin_i   (sin_a nonzero on even lanes)
    #   out[2i+1] = x[2i+1]*cos_i + x[2i]*sin_i   (sin_b nonzero on odd  lanes)
    # The roll wrap-around across head / tensor boundaries only lands on lanes
    # where the corresponding sin table is zero, so it never leaks across heads.
    # Requires an even head_dim (asserted in the wrapper).
    left = jnp.roll(x, -1, axis=1)    # left[:, j]  = x[:, j+1]
    right = jnp.roll(x, 1, axis=1)    # right[:, j] = x[:, j-1]
    return x * cos + left * sin_a + right * sin_b


# ----------------------------- fused layer-stack kernel -----------------------------

def transformer_layers_kernel(
        x0_ref, cos_ref, sina_ref, sinb_ref,
        anw_ref, wqkv_ref, wo_ref, fnw_ref, w13_ref, w2_ref,
        h_out_ref,
        h_scr, o_scr,
        *, n_heads, n_kv_heads, head_dim, hidden_dim, eps):
    layer = pl.program_id(1)
    n_layers = pl.num_programs(1)

    Hq = n_heads * head_dim
    Hk = n_kv_heads * head_dim
    n_rep = n_heads // n_kv_heads

    @pl.when(layer == 0)
    def _():
        h_scr[...] = x0_ref[...]

    x = h_scr[...]                                       # (S, D) f32 residual
    S = x.shape[0]

    # ---------------- attention ----------------
    hn = _rmsnorm(x, anw_ref[...], eps).astype(jnp.bfloat16)
    qkv = jnp.dot(hn, wqkv_ref[...],
                  preferred_element_type=jnp.float32)    # (S, Hq + 2*Hk); q-scale folded
    q = qkv[:, :Hq]
    k = qkv[:, Hq:Hq + Hk]
    v = qkv[:, Hq + Hk:]

    q = _rotary(q, cos_ref[...], sina_ref[...], sinb_ref[...])
    k = _rotary(k, cos_ref[:, :Hk], sina_ref[:, :Hk], sinb_ref[:, :Hk])

    # block-local causal mask, built in-kernel (no HBM mask traffic)
    row = lax.broadcasted_iota(jnp.int32, (S, S), 0)
    col = lax.broadcasted_iota(jnp.int32, (S, S), 1)
    mask = jnp.where(col <= row, 0.0, -1e30)             # exp() underflows to exactly 0

    # per-head softmax: per-head row max + lane-reduction denominator (no dmap)
    for h in range(n_heads):
        g = h // n_rep
        q_h = q[:, h * head_dim:(h + 1) * head_dim]
        k_h = k[:, g * head_dim:(g + 1) * head_dim]
        v_h = v[:, g * head_dim:(g + 1) * head_dim]
        s = lax.dot_general(q_h, k_h, (((1,), (1,)), ((), ())),
                            preferred_element_type=jnp.float32) + mask   # (S, S)
        m = jnp.max(s, axis=-1, keepdims=True)
        p = jnp.exp(s - m)
        denom = jnp.sum(p, axis=-1, keepdims=True)       # >= 1, no clamp needed
        o_h = jnp.dot(p, v_h, preferred_element_type=jnp.float32)
        o_scr[:, h * head_dim:(h + 1) * head_dim] = (
            o_h * pl.reciprocal(denom, approx=True))

    attn = jnp.dot(o_scr[...].astype(jnp.bfloat16), wo_ref[...],
                   preferred_element_type=jnp.float32)   # single wo matmul
    h1 = x + attn

    # ---------------- SwiGLU feed-forward (w1/w3 fused) ----------------
    fn = _rmsnorm(h1, fnw_ref[...], eps).astype(jnp.bfloat16)
    a13 = jnp.dot(fn, w13_ref[...], preferred_element_type=jnp.float32)  # (S, 2*Hf)
    a = a13[:, :hidden_dim]
    g3 = a13[:, hidden_dim:]
    silu = a * pl.reciprocal(1.0 + jnp.exp(-a), approx=True)
    f = jnp.dot((silu * g3).astype(jnp.bfloat16), w2_ref[...],
                preferred_element_type=jnp.float32)

    h2 = h1 + f
    h_scr[...] = h2

    @pl.when(layer == n_layers - 1)
    def _():
        h_out_ref[...] = h2


# ----------------------------- output-head kernel -----------------------------

def output_head_kernel(h_ref, nw_ref, wout_ref, logits_ref, *, eps):
    hf = _rmsnorm(h_ref[...], nw_ref[...], eps).astype(jnp.bfloat16)
    logits_ref[...] = jnp.dot(hf, wout_ref[...], preferred_element_type=jnp.float32)


# ----------------------------- wrapper -----------------------------

def precompute_rope(head_dim, seqlen, theta):
    # matches precompute_freqs_complex_exponential (cos/sin of outer(t, inv_freq))
    even = jnp.arange(0, head_dim, 2, dtype=jnp.float32)[: head_dim // 2]
    inv_freq = 1.0 / (theta ** (even / head_dim))
    t = jnp.arange(seqlen, dtype=jnp.float32)
    freqs = jnp.outer(t, inv_freq)                       # (seqlen, head_dim//2)
    return jnp.cos(freqs), jnp.sin(freqs)


def transformer_forward(input_ids, params, cfg, start_position=0):
    B, S = input_ids.shape
    D, H, KVH, L = cfg["dim"], cfg["n_heads"], cfg["n_kv_heads"], cfg["n_layers"]
    V = cfg["vocab_size"]
    hd = D // H
    assert hd % 2 == 0, "interleaved rotary requires an even head_dim"
    Hq, Hk = H * hd, KVH * hd
    Hf = params["w2_t"].shape[1]
    eps = cfg["norm_eps"]

    # token embedding (plain JAX gather), shaped (B, S, D)
    x0 = jnp.take(params["tok_embeddings"], input_ids.reshape(-1), axis=0)
    x0 = x0.reshape(B, S, D)

    # rotary tables in "x*cos + roll(x,-1)*sin_a + roll(x,+1)*sin_b" form,
    # tiled per query head along lanes; k uses the first Hk lanes of the same tables
    cos, sin = precompute_rope(hd, cfg["max_seq_len"] * 2, cfg["rope_theta"])
    cos = cos[start_position:start_position + S]
    sin = sin[start_position:start_position + S]
    cos2 = jnp.repeat(cos, 2, axis=-1)                   # (S, hd): c0,c0,c1,c1,...
    sin2 = jnp.repeat(sin, 2, axis=-1)
    even = (jnp.arange(hd) % 2) == 0
    sin_a = jnp.where(even, -sin2, 0.0)                  # nonzero at even lanes
    sin_b = jnp.where(even, 0.0, sin2)                   # nonzero at odd lanes
    cos_t = jnp.tile(cos2, (1, H)).astype(jnp.float32)   # (S, Hq)
    sa_t = jnp.tile(sin_a, (1, H)).astype(jnp.float32)
    sb_t = jnp.tile(sin_b, (1, H)).astype(jnp.float32)

    kern = functools.partial(transformer_layers_kernel, n_heads=H, n_kv_heads=KVH,
                             head_dim=hd, hidden_dim=Hf, eps=eps)

    # NOTE(perf): on v7x the constant-index inputs below (rope tables) could also
    # use pipeline_mode=pl.Buffered(1) to drop their double buffer; they are tiny.
    def const_spec(shape):
        z = (0,) * len(shape)
        return pl.BlockSpec(shape, lambda b, l: z)

    def batch_spec(shape):
        z = (0,) * len(shape)
        return pl.BlockSpec((None,) + tuple(shape), lambda b, l: (b,) + z)

    def layer_spec(shape):
        z = (0,) * len(shape)
        return pl.BlockSpec((None,) + tuple(shape), lambda b, l: (l,) + z)

    h_final = pl.pallas_call(
        kern,
        out_shape=jax.ShapeDtypeStruct((B, S, D), jnp.float32),
        grid=(B, L),
        in_specs=[
            batch_spec((S, D)),                  # x0 (per batch)
            const_spec((S, Hq)),                 # cos
            const_spec((S, Hq)),                 # sin_a
            const_spec((S, Hq)),                 # sin_b
            layer_spec((1, D)),                  # attention norm weight
            layer_spec((D, Hq + 2 * Hk)),        # fused wqkv (q columns pre-scaled)
            layer_spec((Hq, D)),                 # wo
            layer_spec((1, D)),                  # ffn norm weight
            layer_spec((D, 2 * Hf)),             # fused w1|w3
            layer_spec((Hf, D)),                 # w2
        ],
        out_specs=pl.BlockSpec((None, S, D), lambda b, l: (b, 0, 0)),
        scratch_shapes=[pltpu.VMEM((S, D), jnp.float32),     # residual carrier
                        pltpu.VMEM((S, Hq), jnp.float32)],   # per-head attn outputs
        compiler_params=pltpu.CompilerParams(
            dimension_semantics=("parallel", "arbitrary")),
    )(x0, cos_t, sa_t, sb_t,
      params["attn_norm_w"], params["wqkv_t"], params["wo_t"],
      params["ffn_norm_w"], params["w13_t"], params["w2_t"])

    # Output head as its own call, gridded over vocab tiles so the (D, V) weight
    # and (M, V) logits are never VMEM-resident during the layer loop.
    M = B * S
    v_tile = V if V <= 2048 else 2048
    assert V % v_tile == 0, "vocab_size must be a multiple of the vocab tile"
    logits = pl.pallas_call(
        functools.partial(output_head_kernel, eps=eps),
        out_shape=jax.ShapeDtypeStruct((M, V), jnp.float32),
        grid=(V // v_tile,),
        in_specs=[pl.BlockSpec((M, D), lambda v: (0, 0)),
                  pl.BlockSpec((1, D), lambda v: (0, 0)),
                  pl.BlockSpec((D, v_tile), lambda v: (0, v))],
        out_specs=pl.BlockSpec((M, v_tile), lambda v: (0, v)),
        compiler_params=pltpu.CompilerParams(dimension_semantics=("parallel",)),
    )(h_final.reshape(M, D), params["norm_w"], params["output_t"])

    return logits.reshape(B, S, V)


# ----------------------------- params -----------------------------

def init_params(key, cfg):
    D, V, H = cfg["dim"], cfg["vocab_size"], cfg["n_heads"]
    KVH, L = cfg["n_kv_heads"], cfg["n_layers"]
    hd = D // H
    Hq, Hk = H * hd, KVH * hd
    hidden = int(2 * (4 * D) / 3)
    mo = cfg["multiple_of"]
    Hf = mo * ((hidden + mo - 1) // mo)

    keys = iter(jax.random.split(key, 2 + 7 * L))

    def lin(k, shape):
        return jax.random.normal(k, shape, jnp.float32) * 0.02

    def stack(shape):
        return jnp.stack([lin(next(keys), shape) for _ in range(L)])

    emb = lin(next(keys), (V, D))
    emb = emb.at[cfg["pad_token_id"]].set(0.0)           # padding_idx row is zero

    scale = 1.0 / math.sqrt(hd)
    wq = stack((D, Hq)) * scale                          # fold attention scale into wq
    wk = stack((D, Hk))
    wv = stack((D, Hk))
    wqkv = jnp.concatenate([wq, wk, wv], axis=-1)        # (L, D, Hq + 2*Hk)
    wo = stack((Hq, D))
    w1 = stack((D, Hf))
    w3 = stack((D, Hf))
    w13 = jnp.concatenate([w1, w3], axis=-1)             # (L, D, 2*Hf)
    w2 = stack((Hf, D))
    out_w = lin(next(keys), (D, V))

    bf16 = jnp.bfloat16
    return dict(
        tok_embeddings=emb,
        attn_norm_w=jnp.ones((L, 1, D), jnp.float32),
        ffn_norm_w=jnp.ones((L, 1, D), jnp.float32),
        wqkv_t=wqkv.astype(bf16),
        wo_t=wo.astype(bf16),
        w13_t=w13.astype(bf16),
        w2_t=w2.astype(bf16),
        norm_w=jnp.ones((1, D), jnp.float32),
        output_t=out_w.astype(bf16),
    )


# ----------------------------- main -----------------------------

if __name__ == "__main__":
    cfg = dict(
        vocab_size=256,
        dim=64,
        n_heads=4,
        n_kv_heads=2,
        n_layers=2,
        max_seq_len=16,
        rope_theta=10000.0,
        norm_eps=1e-6,
        multiple_of=32,
        pad_token_id=0,
    )
    B, S = 2, 8   # NOTE: toy size; benchmark with >=256 rows per core for real numbers

    root = jax.random.PRNGKey(0)
    k_par, k_ids = jax.random.split(root)
    params = init_params(k_par, cfg)
    input_ids = jax.random.randint(k_ids, (B, S), 0, cfg["vocab_size"], dtype=jnp.int32)

    logits = transformer_forward(input_ids, params, cfg)
    logits = jax.block_until_ready(logits)

    assert logits.shape == (B, S, cfg["vocab_size"])
    assert bool(jnp.all(jnp.isfinite(logits)))
    print("KERNEL_OK")
</pallas_src>

<mosaic_0001>
module attributes {stable_mosaic.version = 11 : i64} {
  func.func @transformer_layers_kernel(%arg0: i32, %arg1: i32, %arg2: memref<1x8x64xf32, #tpu.memory_space<vmem>>, %arg3: memref<8x64xf32, #tpu.memory_space<vmem>>, %arg4: memref<8x64xf32, #tpu.memory_space<vmem>>, %arg5: memref<8x64xf32, #tpu.memory_space<vmem>>, %arg6: memref<1x1x64xf32, #tpu.memory_space<vmem>>, %arg7: memref<1x64x128xbf16, #tpu.memory_space<vmem>>, %arg8: memref<1x64x64xbf16, #tpu.memory_space<vmem>>, %arg9: memref<1x1x64xf32, #tpu.memory_space<vmem>>, %arg10: memref<1x64x384xbf16, #tpu.memory_space<vmem>>, %arg11: memref<1x192x64xbf16, #tpu.memory_space<vmem>>, %arg12: memref<1x8x64xf32, #tpu.memory_space<vmem>>, %arg13: memref<8x64xf32, #tpu.memory_space<vmem>>, %arg14: memref<8x64xf32, #tpu.memory_space<vmem>>) attributes {dimension_semantics = [#tpu.dimension_semantics<parallel>, #tpu.dimension_semantics<arbitrary>], iteration_bounds = array<i64: 2, 2>, scalar_prefetch = 0 : i64, scratch_operands = 2 : i64, tpu.core_type = #tpu.core_type<tc>, window_params = [{transform_indices = @transform_0, window_bounds = array<i64: 1, 8, 64>}, {pipeline_mode = #tpu.pipeline_mode<synchronous>, transform_indices = @transform_1, window_bounds = array<i64: 8, 64>}, {pipeline_mode = #tpu.pipeline_mode<synchronous>, transform_indices = @transform_2, window_bounds = array<i64: 8, 64>}, {pipeline_mode = #tpu.pipeline_mode<synchronous>, transform_indices = @transform_3, window_bounds = array<i64: 8, 64>}, {transform_indices = @transform_4, window_bounds = array<i64: 1, 1, 64>}, {transform_indices = @transform_5, window_bounds = array<i64: 1, 64, 128>}, {transform_indices = @transform_6, window_bounds = array<i64: 1, 64, 64>}, {transform_indices = @transform_7, window_bounds = array<i64: 1, 1, 64>}, {transform_indices = @transform_8, window_bounds = array<i64: 1, 64, 384>}, {transform_indices = @transform_9, window_bounds = array<i64: 1, 192, 64>}, {transform_indices = @transform_10, window_bounds = array<i64: 1, 8, 64>}]} {
    %c0_i32 = arith.constant 0 : i32
    %0 = arith.cmpi eq, %arg1, %c0_i32 : i32
    %1 = arith.extui %0 : i1 to i32
    %c0_i32_0 = arith.constant 0 : i32
    %2 = arith.cmpi ne, %1, %c0_i32_0 : i32
    scf.if %2 {
      %c0_71 = arith.constant 0 : index
      %c0_72 = arith.constant 0 : index
      %c0_73 = arith.constant 0 : index
      %170 = vector.load %arg2[%c0_71, %c0_72, %c0_73] : memref<1x8x64xf32, #tpu.memory_space<vmem>>, vector<1x8x64xf32>
      %171 = vector.shape_cast %170 : vector<1x8x64xf32> to vector<8x64xf32>
      %c0_74 = arith.constant 0 : index
      %c0_75 = arith.constant 0 : index
      %172 = vector.load %arg13[%c0_74, %c0_75] : memref<8x64xf32, #tpu.memory_space<vmem>>, vector<8x64xf32>
      tpu.vector_store %arg13[%c0_74, %c0_75], %171 {strides = array<i32>} : memref<8x64xf32, #tpu.memory_space<vmem>>, vector<8x64xf32>,
    } else {
    }
    %c0 = arith.constant 0 : index
    %c0_1 = arith.constant 0 : index
    %3 = vector.load %arg13[%c0, %c0_1] : memref<8x64xf32, #tpu.memory_space<vmem>>, vector<8x64xf32>
    %c0_2 = arith.constant 0 : index
    %c0_3 = arith.constant 0 : index
    %c0_4 = arith.constant 0 : index
    %4 = vector.load %arg6[%c0_2, %c0_3, %c0_4] : memref<1x1x64xf32, #tpu.memory_space<vmem>>, vector<1x1x64xf32>
    %5 = vector.shape_cast %4 : vector<1x1x64xf32> to vector<1x64xf32>
    %6 = arith.mulf %3, %3 : vector<8x64xf32>
    %cst = arith.constant dense<0.000000e+00> : vector<8xf32>
    %7 = vector.multi_reduction <add>, %6, %cst [1] : vector<8x64xf32> to vector<8xf32>
    %8 = vector.shape_cast %7 : vector<8xf32> to vector<8x1xf32>
    %cst_5 = arith.constant 6.400000e+01 : f32
    %9 = vector.broadcast %cst_5 : f32 to vector<8x1xf32>
    %10 = arith.divf %8, %9 : vector<8x1xf32>
    %cst_6 = arith.constant 9.99999997E-7 : f32
    %11 = vector.broadcast %cst_6 : f32 to vector<8x1xf32>
    %12 = arith.addf %10, %11 : vector<8x1xf32>
    %13 = math.rsqrt %12 : vector<8x1xf32>
    %14 = vector.broadcast %13 : vector<8x1xf32> to vector<8x64xf32>
    %15 = arith.mulf %3, %14 : vector<8x64xf32>
    %16 = vector.broadcast %5 : vector<1x64xf32> to vector<8x64xf32>
    %17 = arith.mulf %15, %16 : vector<8x64xf32>
    %18 = arith.truncf %17 : vector<8x64xf32> to vector<8x64xbf16>
    %c0_7 = arith.constant 0 : index
    %c0_8 = arith.constant 0 : index
    %c0_9 = arith.constant 0 : index
    %19 = vector.load %arg7[%c0_7, %c0_8, %c0_9] : memref<1x64x128xbf16, #tpu.memory_space<vmem>>, vector<1x64x128xbf16>
    %20 = vector.shape_cast %19 : vector<1x64x128xbf16> to vector<64x128xbf16>
    %cst_10 = arith.constant dense<0.000000e+00> : vector<8x128xf32>
    %21 = tpu.matmul %18, %20, %cst_10 {dimension_numbers = #tpu.dot_dimension_numbers<[1], [0], [0], [1], [0, 0, 1, 1], [], []>} : vector<8x64xbf16>, vector<64x128xbf16>, vector<8x128xf32> -> vector<8x128xf32>
    %22 = vector.extract_strided_slice %21 {offsets = [0, 0], sizes = [8, 64], strides = [1, 1]} : vector<8x128xf32> to vector<8x64xf32>
    %23 = vector.extract_strided_slice %21 {offsets = [0, 64], sizes = [8, 32], strides = [1, 1]} : vector<8x128xf32> to vector<8x32xf32>
    %24 = vector.extract_strided_slice %21 {offsets = [0, 96], sizes = [8, 32], strides = [1, 1]} : vector<8x128xf32> to vector<8x32xf32>
    %c0_11 = arith.constant 0 : index
    %c0_12 = arith.constant 0 : index
    %25 = vector.load %arg3[%c0_11, %c0_12] : memref<8x64xf32, #tpu.memory_space<vmem>>, vector<8x64xf32>
    %c0_13 = arith.constant 0 : index
    %c0_14 = arith.constant 0 : index
    %26 = vector.load %arg4[%c0_13, %c0_14] : memref<8x64xf32, #tpu.memory_space<vmem>>, vector<8x64xf32>
    %c0_15 = arith.constant 0 : index
    %c0_16 = arith.constant 0 : index
    %27 = vector.load %arg5[%c0_15, %c0_16] : memref<8x64xf32, #tpu.memory_space<vmem>>, vector<8x64xf32>
    %28 = vector.extract_strided_slice %22 {offsets = [0, 1], sizes = [8, 63], strides = [1, 1]} : vector<8x64xf32> to vector<8x63xf32>
    %29 = vector.extract_strided_slice %22 {offsets = [0, 0], sizes = [8, 1], strides = [1, 1]} : vector<8x64xf32> to vector<8x1xf32>
    %30 = tpu.concatenate %28, %29 in 1 : vector<8x63xf32>, vector<8x1xf32> -> vector<8x64xf32>
    %31 = vector.extract_strided_slice %22 {offsets = [0, 63], sizes = [8, 1], strides = [1, 1]} : vector<8x64xf32> to vector<8x1xf32>
    %32 = vector.extract_strided_slice %22 {offsets = [0, 0], sizes = [8, 63], strides = [1, 1]} : vector<8x64xf32> to vector<8x63xf32>
    %33 = tpu.concatenate %31, %32 in 1 : vector<8x1xf32>, vector<8x63xf32> -> vector<8x64xf32>
    %34 = arith.mulf %22, %25 : vector<8x64xf32>
    %35 = arith.mulf %30, %26 : vector<8x64xf32>
    %36 = arith.addf %34, %35 : vector<8x64xf32>
    %37 = arith.mulf %33, %27 : vector<8x64xf32>
    %38 = arith.addf %36, %37 : vector<8x64xf32>
    %c0_17 = arith.constant 0 : index
    %c0_18 = arith.constant 0 : index
    %39 = vector.load %arg3[%c0_17, %c0_18] : memref<8x64xf32, #tpu.memory_space<vmem>>, vector<8x32xf32>
    %c0_19 = arith.constant 0 : index
    %c0_20 = arith.constant 0 : index
    %40 = vector.load %arg4[%c0_19, %c0_20] : memref<8x64xf32, #tpu.memory_space<vmem>>, vector<8x32xf32>
    %c0_21 = arith.constant 0 : index
    %c0_22 = arith.constant 0 : index
    %41 = vector.load %arg5[%c0_21, %c0_22] : memref<8x64xf32, #tpu.memory_space<vmem>>, vector<8x32xf32>
    %42 = vector.extract_strided_slice %23 {offsets = [0, 1], sizes = [8, 31], strides = [1, 1]} : vector<8x32xf32> to vector<8x31xf32>
    %43 = vector.extract_strided_slice %23 {offsets = [0, 0], sizes = [8, 1], strides = [1, 1]} : vector<8x32xf32> to vector<8x1xf32>
    %44 = tpu.concatenate %42, %43 in 1 : vector<8x31xf32>, vector<8x1xf32> -> vector<8x32xf32>
    %45 = vector.extract_strided_slice %23 {offsets = [0, 31], sizes = [8, 1], strides = [1, 1]} : vector<8x32xf32> to vector<8x1xf32>
    %46 = vector.extract_strided_slice %23 {offsets = [0, 0], sizes = [8, 31], strides = [1, 1]} : vector<8x32xf32> to vector<8x31xf32>
    %47 = tpu.concatenate %45, %46 in 1 : vector<8x1xf32>, vector<8x31xf32> -> vector<8x32xf32>
    %48 = arith.mulf %23, %39 : vector<8x32xf32>
    %49 = arith.mulf %44, %40 : vector<8x32xf32>
    %50 = arith.addf %48, %49 : vector<8x32xf32>
    %51 = arith.mulf %47, %41 : vector<8x32xf32>
    %52 = arith.addf %50, %51 : vector<8x32xf32>
    %53 = tpu.iota {dimensions = array<i32: 0>} : vector<8x8xi32>
    %54 = tpu.iota {dimensions = array<i32: 1>} : vector<8x8xi32>
    %55 = arith.cmpi sle, %54, %53 : vector<8x8xi32>
    %cst_23 = arith.constant 0.000000e+00 : f32
    %cst_24 = arith.constant -1.000000e+30 : f32
    %56 = vector.broadcast %cst_23 : f32 to vector<8x8xf32>
    %57 = vector.broadcast %cst_24 : f32 to vector<8x8xf32>
    %58 = arith.select %55, %56, %57 : vector<8x8xi1>, vector<8x8xf32>
    %59 = vector.extract_strided_slice %38 {offsets = [0, 0], sizes = [8, 16], strides = [1, 1]} : vector<8x64xf32> to vector<8x16xf32>
    %60 = vector.extract_strided_slice %52 {offsets = [0, 0], sizes = [8, 16], strides = [1, 1]} : vector<8x32xf32> to vector<8x16xf32>
    %61 = vector.extract_strided_slice %24 {offsets = [0, 0], sizes = [8, 16], strides = [1, 1]} : vector<8x32xf32> to vector<8x16xf32>
    %cst_25 = arith.constant dense<0.000000e+00> : vector<8x8xf32>
    %62 = tpu.matmul %59, %60, %cst_25 {dimension_numbers = #tpu.dot_dimension_numbers<[1], [1], [0], [0], [0, 0, 1, 0], [], []>} : vector<8x16xf32>, vector<8x16xf32>, vector<8x8xf32> -> vector<8x8xf32>
    %63 = arith.addf %62, %58 : vector<8x8xf32>
    %cst_26 = arith.constant dense<0xFF800000> : vector<8xf32>
    %64 = vector.multi_reduction <maximumf>, %63, %cst_26 [1] : vector<8x8xf32> to vector<8xf32>
    %65 = vector.shape_cast %64 : vector<8xf32> to vector<8x1xf32>
    %66 = vector.broadcast %65 : vector<8x1xf32> to vector<8x8xf32>
    %67 = arith.subf %63, %66 : vector<8x8xf32>
    %68 = math.exp %67 : vector<8x8xf32>
    %cst_27 = arith.constant dense<0.000000e+00> : vector<8xf32>
    %69 = vector.multi_reduction <add>, %68, %cst_27 [1] : vector<8x8xf32> to vector<8xf32>
    %70 = vector.shape_cast %69 : vector<8xf32> to vector<8x1xf32>
    %cst_28 = arith.constant dense<0.000000e+00> : vector<8x16xf32>
    %71 = tpu.matmul %68, %61, %cst_28 {dimension_numbers = #tpu.dot_dimension_numbers<[1], [0], [0], [1], [0, 0, 1, 1], [], []>} : vector<8x8xf32>, vector<8x16xf32>, vector<8x16xf32> -> vector<8x16xf32>
    %72 = tpu.reciprocal %70 {approx = true} : vector<8x1xf32> -> vector<8x1xf32>
    %73 = vector.broadcast %72 : vector<8x1xf32> to vector<8x16xf32>
    %74 = arith.mulf %71, %73 : vector<8x16xf32>
    %c0_29 = arith.constant 0 : index
    %c0_30 = arith.constant 0 : index
    %75 = vector.load %arg14[%c0_29, %c0_30] : memref<8x64xf32, #tpu.memory_space<vmem>>, vector<8x16xf32>
    tpu.vector_store %arg14[%c0_29, %c0_30], %74 {strides = array<i32>} : memref<8x64xf32, #tpu.memory_space<vmem>>, vector<8x16xf32>,
    %76 = vector.extract_strided_slice %38 {offsets = [0, 16], sizes = [8, 16], strides = [1, 1]} : vector<8x64xf32> to vector<8x16xf32>
    %77 = vector.extract_strided_slice %52 {offsets = [0, 0], sizes = [8, 16], strides = [1, 1]} : vector<8x32xf32> to vector<8x16xf32>
    %78 = vector.extract_strided_slice %24 {offsets = [0, 0], sizes = [8, 16], strides = [1, 1]} : vector<8x32xf32> to vector<8x16xf32>
    %cst_31 = arith.constant dense<0.000000e+00> : vector<8x8xf32>
    %79 = tpu.matmul %76, %77, %cst_31 {dimension_numbers = #tpu.dot_dimension_numbers<[1], [1], [0], [0], [0, 0, 1, 0], [], []>} : vector<8x16xf32>, vector<8x16xf32>, vector<8x8xf32> -> vector<8x8xf32>
    %80 = arith.addf %79, %58 : vector<8x8xf32>
    %cst_32 = arith.constant dense<0xFF800000> : vector<8xf32>
    %81 = vector.multi_reduction <maximumf>, %80, %cst_32 [1] : vector<8x8xf32> to vector<8xf32>
    %82 = vector.shape_cast %81 : vector<8xf32> to vector<8x1xf32>
    %83 = vector.broadcast %82 : vector<8x1xf32> to vector<8x8xf32>
    %84 = arith.subf %80, %83 : vector<8x8xf32>
    %85 = math.exp %84 : vector<8x8xf32>
    %cst_33 = arith.constant dense<0.000000e+00> : vector<8xf32>
    %86 = vector.multi_reduction <add>, %85, %cst_33 [1] : vector<8x8xf32> to vector<8xf32>
    %87 = vector.shape_cast %86 : vector<8xf32> to vector<8x1xf32>
    %cst_34 = arith.constant dense<0.000000e+00> : vector<8x16xf32>
    %88 = tpu.matmul %85, %78, %cst_34 {dimension_numbers = #tpu.dot_dimension_numbers<[1], [0], [0], [1], [0, 0, 1, 1], [], []>} : vector<8x8xf32>, vector<8x16xf32>, vector<8x16xf32> -> vector<8x16xf32>
    %89 = tpu.reciprocal %87 {approx = true} : vector<8x1xf32> -> vector<8x1xf32>
    %90 = vector.broadcast %89 : vector<8x1xf32> to vector<8x16xf32>
    %91 = arith.mulf %88, %90 : vector<8x16xf32>
    %c0_35 = arith.constant 0 : index
    %c16 = arith.constant 16 : index
    %92 = vector.load %arg14[%c0_35, %c16] : memref<8x64xf32, #tpu.memory_space<vmem>>, vector<8x16xf32>
    tpu.vector_store %arg14[%c0_35, %c16], %91 {strides = array<i32>} : memref<8x64xf32, #tpu.memory_space<vmem>>, vector<8x16xf32>,
    %93 = vector.extract_strided_slice %38 {offsets = [0, 32], sizes = [8, 16], strides = [1, 1]} : vector<8x64xf32> to vector<8x16xf32>
    %94 = vector.extract_strided_slice %52 {offsets = [0, 16], sizes = [8, 16], strides = [1, 1]} : vector<8x32xf32> to vector<8x16xf32>
    %95 = vector.extract_strided_slice %24 {offsets = [0, 16], sizes = [8, 16], strides = [1, 1]} : vector<8x32xf32> to vector<8x16xf32>
    %cst_36 = arith.constant dense<0.000000e+00> : vector<8x8xf32>
    %96 = tpu.matmul %93, %94, %cst_36 {dimension_numbers = #tpu.dot_dimension_numbers<[1], [1], [0], [0], [0, 0, 1, 0], [], []>} : vector<8x16xf32>, vector<8x16xf32>, vector<8x8xf32> -> vector<8x8xf32>
    %97 = arith.addf %96, %58 : vector<8x8xf32>
    %cst_37 = arith.constant dense<0xFF800000> : vector<8xf32>
    %98 = vector.multi_reduction <maximumf>, %97, %cst_37 [1] : vector<8x8xf32> to vector<8xf32>
    %99 = vector.shape_cast %98 : vector<8xf32> to vector<8x1xf32>
    %100 = vector.broadcast %99 : vector<8x1xf32> to vector<8x8xf32>
    %101 = arith.subf %97, %100 : vector<8x8xf32>
    %102 = math.exp %101 : vector<8x8xf32>
    %cst_38 = arith.constant dense<0.000000e+00> : vector<8xf32>
    %103 = vector.multi_reduction <add>, %102, %cst_38 [1] : vector<8x8xf32> to vector<8xf32>
    %104 = vector.shape_cast %103 : vector<8xf32> to vector<8x1xf32>
    %cst_39 = arith.constant dense<0.000000e+00> : vector<8x16xf32>
    %105 = tpu.matmul %102, %95, %cst_39 {dimension_numbers = #tpu.dot_dimension_numbers<[1], [0], [0], [1], [0, 0, 1, 1], [], []>} : vector<8x8xf32>, vector<8x16xf32>, vector<8x16xf32> -> vector<8x16xf32>
    %106 = tpu.reciprocal %104 {approx = true} : vector<8x1xf32> -> vector<8x1xf32>
    %107 = vector.broadcast %106 : vector<8x1xf32> to vector<8x16xf32>
    %108 = arith.mulf %105, %107 : vector<8x16xf32>
    %c0_40 = arith.constant 0 : index
    %c32 = arith.constant 32 : index
    %109 = vector.load %arg14[%c0_40, %c32] : memref<8x64xf32, #tpu.memory_space<vmem>>, vector<8x16xf32>
    tpu.vector_store %arg14[%c0_40, %c32], %108 {strides = array<i32>} : memref<8x64xf32, #tpu.memory_space<vmem>>, vector<8x16xf32>,
    %110 = vector.extract_strided_slice %38 {offsets = [0, 48], sizes = [8, 16], strides = [1, 1]} : vector<8x64xf32> to vector<8x16xf32>
    %111 = vector.extract_strided_slice %52 {offsets = [0, 16], sizes = [8, 16], strides = [1, 1]} : vector<8x32xf32> to vector<8x16xf32>
    %112 = vector.extract_strided_slice %24 {offsets = [0, 16], sizes = [8, 16], strides = [1, 1]} : vector<8x32xf32> to vector<8x16xf32>
    %cst_41 = arith.constant dense<0.000000e+00> : vector<8x8xf32>
    %113 = tpu.matmul %110, %111, %cst_41 {dimension_numbers = #tpu.dot_dimension_numbers<[1], [1], [0], [0], [0, 0, 1, 0], [], []>} : vector<8x16xf32>, vector<8x16xf32>, vector<8x8xf32> -> vector<8x8xf32>
    %114 = arith.addf %113, %58 : vector<8x8xf32>
    %cst_42 = arith.constant dense<0xFF800000> : vector<8xf32>
    %115 = vector.multi_reduction <maximumf>, %114, %cst_42 [1] : vector<8x8xf32> to vector<8xf32>
    %116 = vector.shape_cast %115 : vector<8xf32> to vector<8x1xf32>
    %117 = vector.broadcast %116 : vector<8x1xf32> to vector<8x8xf32>
    %118 = arith.subf %114, %117 : vector<8x8xf32>
    %119 = math.exp %118 : vector<8x8xf32>
    %cst_43 = arith.constant dense<0.000000e+00> : vector<8xf32>
    %120 = vector.multi_reduction <add>, %119, %cst_43 [1] : vector<8x8xf32> to vector<8xf32>
    %121 = vector.shape_cast %120 : vector<8xf32> to vector<8x1xf32>
    %cst_44 = arith.constant dense<0.000000e+00> : vector<8x16xf32>
    %122 = tpu.matmul %119, %112, %cst_44 {dimension_numbers = #tpu.dot_dimension_numbers<[1], [0], [0], [1], [0, 0, 1, 1], [], []>} : vector<8x8xf32>, vector<8x16xf32>, vector<8x16xf32> -> vector<8x16xf32>
    %123 = tpu.reciprocal %121 {approx = true} : vector<8x1xf32> -> vector<8x1xf32>
    %124 = vector.broadcast %123 : vector<8x1xf32> to vector<8x16xf32>
    %125 = arith.mulf %122, %124 : vector<8x16xf32>
    %c0_45 = arith.constant 0 : index
    %c48 = arith.constant 48 : index
    %126 = vector.load %arg14[%c0_45, %c48] : memref<8x64xf32, #tpu.memory_space<vmem>>, vector<8x16xf32>
    tpu.vector_store %arg14[%c0_45, %c48], %125 {strides = array<i32>} : memref<8x64xf32, #tpu.memory_space<vmem>>, vector<8x16xf32>,
    %c0_46 = arith.constant 0 : index
    %c0_47 = arith.constant 0 : index
    %127 = vector.load %arg14[%c0_46, %c0_47] : memref<8x64xf32, #tpu.memory_space<vmem>>, vector<8x64xf32>
    %128 = arith.truncf %127 : vector<8x64xf32> to vector<8x64xbf16>
    %c0_48 = arith.constant 0 : index
    %c0_49 = arith.constant 0 : index
    %c0_50 = arith.constant 0 : index
    %129 = vector.load %arg8[%c0_48, %c0_49, %c0_50] : memref<1x64x64xbf16, #tpu.memory_space<vmem>>, vector<1x64x64xbf16>
    %130 = vector.shape_cast %129 : vector<1x64x64xbf16> to vector<64x64xbf16>
    %cst_51 = arith.constant dense<0.000000e+00> : vector<8x64xf32>
    %131 = tpu.matmul %128, %130, %cst_51 {dimension_numbers = #tpu.dot_dimension_numbers<[1], [0], [0], [1], [0, 0, 1, 1], [], []>} : vector<8x64xbf16>, vector<64x64xbf16>, vector<8x64xf32> -> vector<8x64xf32>
    %132 = arith.addf %3, %131 : vector<8x64xf32>
    %c0_52 = arith.constant 0 : index
    %c0_53 = arith.constant 0 : index
    %c0_54 = arith.constant 0 : index
    %133 = vector.load %arg9[%c0_52, %c0_53, %c0_54] : memref<1x1x64xf32, #tpu.memory_space<vmem>>, vector<1x1x64xf32>
    %134 = vector.shape_cast %133 : vector<1x1x64xf32> to vector<1x64xf32>
    %135 = arith.mulf %132, %132 : vector<8x64xf32>
    %cst_55 = arith.constant dense<0.000000e+00> : vector<8xf32>
    %136 = vector.multi_reduction <add>, %135, %cst_55 [1] : vector<8x64xf32> to vector<8xf32>
    %137 = vector.shape_cast %136 : vector<8xf32> to vector<8x1xf32>
    %cst_56 = arith.constant 6.400000e+01 : f32
    %138 = vector.broadcast %cst_56 : f32 to vector<8x1xf32>
    %139 = arith.divf %137, %138 : vector<8x1xf32>
    %cst_57 = arith.constant 9.99999997E-7 : f32
    %140 = vector.broadcast %cst_57 : f32 to vector<8x1xf32>
    %141 = arith.addf %139, %140 : vector<8x1xf32>
    %142 = math.rsqrt %141 : vector<8x1xf32>
    %143 = vector.broadcast %142 : vector<8x1xf32> to vector<8x64xf32>
    %144 = arith.mulf %132, %143 : vector<8x64xf32>
    %145 = vector.broadcast %134 : vector<1x64xf32> to vector<8x64xf32>
    %146 = arith.mulf %144, %145 : vector<8x64xf32>
    %147 = arith.truncf %146 : vector<8x64xf32> to vector<8x64xbf16>
    %c0_58 = arith.constant 0 : index
    %c0_59 = arith.constant 0 : index
    %c0_60 = arith.constant 0 : index
    %148 = vector.load %arg10[%c0_58, %c0_59, %c0_60] : memref<1x64x384xbf16, #tpu.memory_space<vmem>>, vector<1x64x384xbf16>
    %149 = vector.shape_cast %148 : vector<1x64x384xbf16> to vector<64x384xbf16>
    %cst_61 = arith.constant dense<0.000000e+00> : vector<8x384xf32>
    %150 = tpu.matmul %147, %149, %cst_61 {dimension_numbers = #tpu.dot_dimension_numbers<[1], [0], [0], [1], [0, 0, 1, 1], [], []>} : vector<8x64xbf16>, vector<64x384xbf16>, vector<8x384xf32> -> vector<8x384xf32>
    %151 = vector.extract_strided_slice %150 {offsets = [0, 0], sizes = [8, 192], strides = [1, 1]} : vector<8x384xf32> to vector<8x192xf32>
    %152 = vector.extract_strided_slice %150 {offsets = [0, 192], sizes = [8, 192], strides = [1, 1]} : vector<8x384xf32> to vector<8x192xf32>
    %cst_62 = arith.constant 0.000000e+00 : f32
    %153 = vector.broadcast %cst_62 : f32 to vector<8x192xf32>
    %154 = arith.subf %153, %151 : vector<8x192xf32>
    %155 = math.exp %154 : vector<8x192xf32>
    %cst_63 = arith.constant 1.000000e+00 : f32
    %156 = vector.broadcast %cst_63 : f32 to vector<8x192xf32>
    %157 = arith.addf %156, %155 : vector<8x192xf32>
    %158 = tpu.reciprocal %157 {approx = true} : vector<8x192xf32> -> vector<8x192xf32>
    %159 = arith.mulf %151, %158 : vector<8x192xf32>
    %160 = arith.mulf %159, %152 : vector<8x192xf32>
    %161 = arith.truncf %160 : vector<8x192xf32> to vector<8x192xbf16>
    %c0_64 = arith.constant 0 : index
    %c0_65 = arith.constant 0 : index
    %c0_66 = arith.constant 0 : index
    %162 = vector.load %arg11[%c0_64, %c0_65, %c0_66] : memref<1x192x64xbf16, #tpu.memory_space<vmem>>, vector<1x192x64xbf16>
    %163 = vector.shape_cast %162 : vector<1x192x64xbf16> to vector<192x64xbf16>
    %cst_67 = arith.constant dense<0.000000e+00> : vector<8x64xf32>
    %164 = tpu.matmul %161, %163, %cst_67 {dimension_numbers = #tpu.dot_dimension_numbers<[1], [0], [0], [1], [0, 0, 1, 1], [], []>} : vector<8x192xbf16>, vector<192x64xbf16>, vector<8x64xf32> -> vector<8x64xf32>
    %165 = arith.addf %132, %164 : vector<8x64xf32>
    %c0_68 = arith.constant 0 : index
    %c0_69 = arith.constant 0 : index
    %166 = vector.load %arg13[%c0_68, %c0_69] : memref<8x64xf32, #tpu.memory_space<vmem>>, vector<8x64xf32>
    tpu.vector_store %arg13[%c0_68, %c0_69], %165 {strides = array<i32>} : memref<8x64xf32, #tpu.memory_space<vmem>>, vector<8x64xf32>,
    %c1_i32 = arith.constant 1 : i32
    %167 = arith.cmpi eq, %arg1, %c1_i32 : i32
    %168 = arith.extui %167 : i1 to i32
    %c0_i32_70 = arith.constant 0 : i32
    %169 = arith.cmpi ne, %168, %c0_i32_70 : i32
    scf.if %169 {
      %c0_71 = arith.constant 0 : index
      %c0_72 = arith.constant 0 : index
      %c0_73 = arith.constant 0 : index
      %170 = vector.load %arg12[%c0_71, %c0_72, %c0_73] : memref<1x8x64xf32, #tpu.memory_space<vmem>>, vector<1x8x64xf32>
      %171 = vector.shape_cast %170 : vector<1x8x64xf32> to vector<8x64xf32>
      %172 = vector.shape_cast %165 : vector<8x64xf32> to vector<1x8x64xf32>
      tpu.vector_store %arg12[%c0_71, %c0_72, %c0_73], %172 {strides = array<i32>} : memref<1x8x64xf32, #tpu.memory_space<vmem>>, vector<1x8x64xf32>,
    } else {
    }
    return
  }
  func.func @transform_0(%arg0: i32, %arg1: i32) -> (i32, i32, i32) {
    %c0_i32 = arith.constant 0 : i32
    %c0_i32_0 = arith.constant 0 : i32
    %c0_i32_1 = arith.constant 0 : i32
    return %arg0, %c0_i32, %c0_i32_0 : i32, i32, i32
  }
  func.func @transform_1(%arg0: i32, %arg1: i32) -> (i32, i32) {
    %c0_i32 = arith.constant 0 : i32
    %c0_i32_0 = arith.constant 0 : i32
    %c0_i32_1 = arith.constant 0 : i32
    return %c0_i32, %c0_i32_0 : i32, i32
  }
  func.func @transform_2(%arg0: i32, %arg1: i32) -> (i32, i32) {
    %c0_i32 = arith.constant 0 : i32
    %c0_i32_0 = arith.constant 0 : i32
    %c0_i32_1 = arith.constant 0 : i32
    return %c0_i32, %c0_i32_0 : i32, i32
  }
  func.func @transform_3(%arg0: i32, %arg1: i32) -> (i32, i32) {
    %c0_i32 = arith.constant 0 : i32
    %c0_i32_0 = arith.constant 0 : i32
    %c0_i32_1 = arith.constant 0 : i32
    return %c0_i32, %c0_i32_0 : i32, i32
  }
  func.func @transform_4(%arg0: i32, %arg1: i32) -> (i32, i32, i32) {
    %c0_i32 = arith.constant 0 : i32
    %c0_i32_0 = arith.constant 0 : i32
    %c0_i32_1 = arith.constant 0 : i32
    return %arg1, %c0_i32, %c0_i32_0 : i32, i32, i32
  }
  func.func @transform_5(%arg0: i32, %arg1: i32) -> (i32, i32, i32) {
    %c0_i32 = arith.constant 0 : i32
    %c0_i32_0 = arith.constant 0 : i32
    %c0_i32_1 = arith.constant 0 : i32
    return %arg1, %c0_i32, %c0_i32_0 : i32, i32, i32
  }
  func.func @transform_6(%arg0: i32, %arg1: i32) -> (i32, i32, i32) {
    %c0_i32 = arith.constant 0 : i32
    %c0_i32_0 = arith.constant 0 : i32
    %c0_i32_1 = arith.constant 0 : i32
    return %arg1, %c0_i32, %c0_i32_0 : i32, i32, i32
  }
  func.func @transform_7(%arg0: i32, %arg1: i32) -> (i32, i32, i32) {
    %c0_i32 = arith.constant 0 : i32
    %c0_i32_0 = arith.constant 0 : i32
    %c0_i32_1 = arith.constant 0 : i32
    return %arg1, %c0_i32, %c0_i32_0 : i32, i32, i32
  }
  func.func @transform_8(%arg0: i32, %arg1: i32) -> (i32, i32, i32) {
    %c0_i32 = arith.constant 0 : i32
    %c0_i32_0 = arith.constant 0 : i32
    %c0_i32_1 = arith.constant 0 : i32
    return %arg1, %c0_i32, %c0_i32_0 : i32, i32, i32
  }
  func.func @transform_9(%arg0: i32, %arg1: i32) -> (i32, i32, i32) {
    %c0_i32 = arith.constant 0 : i32
    %c0_i32_0 = arith.constant 0 : i32
    %c0_i32_1 = arith.constant 0 : i32
    return %arg1, %c0_i32, %c0_i32_0 : i32, i32, i32
  }
  func.func @transform_10(%arg0: i32, %arg1: i32) -> (i32, i32, i32) {
    %c0_i32 = arith.constant 0 : i32
    %c0_i32_0 = arith.constant 0 : i32
    %c0_i32_1 = arith.constant 0 : i32
    return %arg0, %c0_i32, %c0_i32_0 : i32, i32, i32
  }
}

</mosaic_0001>

<llo_original>
// kernel: tpu_custom_call.1
$region0: #{tpu_custom_call.1}
  #allocation0 [shape = 'u32[]', space=smem, size = 0x4, offset = 0x4, fixed_abs, tag = 'smem constant byte address 0x4 - core index']
  #allocation1 [shape = 'u32[144,128]{1,0:T(1,128)}', space=vmem, size = 0x12000, scoped, tag = 'internal scratch']
  #allocation2 [shape = 'f32[8,64]{1,0:T(8,128)}', space=vmem, size = 0x1000, scoped, tag = 'scratch operand']
  #allocation3 [shape = 'f32[8,64]{1,0:T(8,128)}', space=vmem, size = 0x1000, scoped, tag = 'scratch operand']
  %s0 = inlined_call_operand.hbm [shape: f32[2,8,64], index: 0, kind: input, shape index: {}]
  %s1 = inlined_call_operand.vmem [shape: f32[8,64], index: 1, kind: input, shape index: {}]
  %s2 = inlined_call_operand.hbm [shape: f32[8,64], index: 2, kind: input, shape index: {}]
  %s3 = inlined_call_operand.hbm [shape: f32[8,64], index: 3, kind: input, shape index: {}]
  %s4 = inlined_call_operand.vmem [shape: f32[2,1,64], index: 4, kind: input, shape index: {}]
  %s5 = inlined_call_operand.vmem [shape: bf16[2,64,128], index: 5, kind: input, shape index: {}]
  %s6 = inlined_call_operand.vmem [shape: bf16[2,64,64], index: 6, kind: input, shape index: {}]
  %s7 = inlined_call_operand.vmem [shape: f32[2,1,64], index: 7, kind: input, shape index: {}]
  %s8 = inlined_call_operand.vmem [shape: bf16[2,64,384], index: 8, kind: input, shape index: {}]
  %s9 = inlined_call_operand.vmem [shape: bf16[2,192,64], index: 9, kind: input, shape index: {}]
  %s10 = inlined_call_operand.hbm [shape: f32[2,8,64], index: 10, kind: output, shape index: {}]
  %s11 = sld [smem:[#allocation0]]
  $region93: #{tpu_custom_call.1} parent=0
    _
  %s13 = ssub.s32 1, %s11
  %s14 = scalar_select 0, %s13, %s11
  $region1: #{tpu_custom_call.1} parent=0
    #allocation4 [shape = 'u8[8192]{0}', space=vmem, size = 0x2000, scoped, tag = 'input window, operand 0']
    #allocation5 [shape = 's32[2]{0}', space=sflag, size = 0x8, scoped, tag = 'scoped memory for tpu_custom_call.1']
    #allocation6 [shape = 's32[2]{0}', space=sflag, size = 0x8, scoped, tag = 'scoped memory for tpu_custom_call.1']
    #allocation7 [shape = 'u8[4096]{0}', space=vmem, size = 0x1000, scoped, tag = 'input window, operand 2, single buffered']
    #allocation8 [shape = 's32[1]{0}', space=sflag, size = 0x4, scoped, tag = 'scoped memory for tpu_custom_call.1']
    #allocation9 [shape = 'u8[4096]{0}', space=vmem, size = 0x1000, scoped, tag = 'input window, operand 3, single buffered']
    #allocation10 [shape = 'u8[8192]{0}', space=vmem, size = 0x2000, scoped, tag = 'output window, operand 0']
    %15 = vsyncpa [#allocation5], 0
    %s16 = scalar_lea.sflag [#allocation5], 1
    %17 = vsyncpa %s16, 0
    %18 = vsyncpa [#allocation8], 0
    %19 = vsyncpa [#allocation6], 0
    %s20 = scalar_lea.sflag [#allocation6], 1
    %21 = vsyncpa %s20, 0
    loop: start=0, step=1, limit=6
    $region2: #{tpu_custom_call.1} parent=1 // loop_pre_header
      _
    $region3: #{tpu_custom_call.1} parent=1 // loop_header
      %s23 = sphi 0, %s27
      %p24 = scmp.ge.s32.totalorder %s23, 6
      %s30 = sphi 0, %s42
      %s31 = sphi 0, %s38
      %s32 = sphi 0, %s30
      %s33 = sphi 0, %s31
      %s34 = sphi 0, %s32
      %s35 = sphi 0, %s33
      %s45 = sphi 0, %s47
      %s48 = sphi 0, %s45
      %s49 = sphi 0, %s48
      %s65 = sphi 0, %s49
      %s69 = sphi 0, %s69
      %s71 = sphi 0, %s69
      %s72 = sphi 0, %s71
      %s86 = sphi 0, %s72
      %s90 = sphi 0, %s90
      %s92 = sphi 0, %s90
      %s93 = sphi 0, %s92
      %s107 = sphi 0, %s93
      %s111 = sphi 0, %s111
      %s113 = sphi 0, %s111
      %s114 = sphi 0, %s113
      %s128 = sphi 0, %s114
      %s134 = sphi 0, %s136
      %s137 = sphi 0, %s134
      %s138 = sphi 0, %s137
      %s154 = sphi 0, %s138
      %s160 = sphi 0, %s162
      %s163 = sphi 0, %s160
      %s164 = sphi 0, %s163
      %s180 = sphi 0, %s164
      %s186 = sphi 0, %s188
      %s189 = sphi 0, %s186
      %s190 = sphi 0, %s189
      %s206 = sphi 0, %s190
      %s212 = sphi 0, %s214
      %s215 = sphi 0, %s212
      %s216 = sphi 0, %s215
      %s232 = sphi 0, %s216
      %s238 = sphi 0, %s240
      %s241 = sphi 0, %s238
      %s242 = sphi 0, %s241
      %s258 = sphi 0, %s242
      %s264 = sphi 0, %s266
      %s267 = sphi 0, %s264
      %s268 = sphi 0, %s267
      %s284 = sphi 0, %s268
      %s290 = sphi 0, %s292
      %s293 = sphi 0, %s290
      %s294 = sphi 0, %s293
      %s310 = sphi 0, %s294
    $region4: #{tpu_custom_call.1} parent=1 // loop_header_branch
      %26 = sbr.rel (%p24) target = $region8
    $region5: #{tpu_custom_call.1} parent=1 // loop_body
      %s28 = ssub.s32 %s23, 1
      %s29 = ssub.s32 %s23, 2
      %s36 = sadd.s32 1, %s31
      %p37 = scmp.ge.s32.totalorder %s36, 2
      %s38 = scalar_select %p37, 0, %s36
      %s39 = sadd.s32 1, %s30
      %s40 = scalar_select %p37, %s39, %s30
      %p41 = scmp.ge.s32.totalorder %s40, 2
      %s42 = scalar_select %p41, 0, %s40
      %s43 = ssub.s32 %s30, %s42
      %p44 = scmp.eq.s32.totalorder %s43, 0
      %s46 = sadd.s32 %s45, 1
      %s47 = scalar_select %p44, %s45, %s46
      %p50 = pneg %p44
      %p51 = scmp.eq.s32.totalorder %s23, 3
      %p52 = por %p50, %p51
      %p53 = scmp.ne.s32.totalorder %s45, %s48
      %p54 = scmp.eq.s32.totalorder %s23, 0
      %p55 = por %p53, %p54
      %p56 = scmp.ne.s32.totalorder %s45, %s48
      %p57 = scmp.eq.s32.totalorder %s28, 3
      %p58 = por %p56, %p57
      %p59 = scmp.ne.s32.totalorder %s48, %s49
      %p60 = scmp.eq.s32.totalorder %s28, 0
      %p61 = por %p59, %p60
      %p62 = scmp.ne.s32.totalorder %s48, %s49
      %p63 = scmp.eq.s32.totalorder %s29, 3
      %p64 = por %p62, %p63
      %p66 = scmp.ne.s32.totalorder %s49, %s65
      %p67 = scmp.eq.s32.totalorder %s29, 0
      %p68 = por %p66, %p67
      %s70 = sadd.s32 %s69, 1
      %p73 = scmp.eq.s32.totalorder %s23, 3
      %p74 = scmp.ne.s32.totalorder %s69, %s71
      %p75 = scmp.eq.s32.totalorder %s23, 0
      %p76 = por %p74, %p75
      %p77 = scmp.ne.s32.totalorder %s69, %s71
      %p78 = scmp.eq.s32.totalorder %s28, 3
      %p79 = por %p77, %p78
      %p80 = scmp.ne.s32.totalorder %s71, %s72
      %p81 = scmp.eq.s32.totalorder %s28, 0
      %p82 = por %p80, %p81
      %p83 = scmp.ne.s32.totalorder %s71, %s72
      %p84 = scmp.eq.s32.totalorder %s29, 3
      %p85 = por %p83, %p84
      %p87 = scmp.ne.s32.totalorder %s72, %s86
      %p88 = scmp.eq.s32.totalorder %s29, 0
      %p89 = por %p87, %p88
      %s91 = sadd.s32 %s90, 1
      %p94 = scmp.eq.s32.totalorder %s23, 3
      %p95 = scmp.ne.s32.totalorder %s90, %s92
      %p96 = scmp.eq.s32.totalorder %s23, 0
      %p97 = por %p95, %p96
      %p98 = scmp.ne.s32.totalorder %s90, %s92
      %p99 = scmp.eq.s32.totalorder %s28, 3
      %p100 = por %p98, %p99
      %p101 = scmp.ne.s32.totalorder %s92, %s93
      %p102 = scmp.eq.s32.totalorder %s28, 0
      %p103 = por %p101, %p102
      %p104 = scmp.ne.s32.totalorder %s92, %s93
      %p105 = scmp.eq.s32.totalorder %s29, 3
      %p106 = por %p104, %p105
      %p108 = scmp.ne.s32.totalorder %s93, %s107
      %p109 = scmp.eq.s32.totalorder %s29, 0
      %p110 = por %p108, %p109
      %s112 = sadd.s32 %s111, 1
      %p115 = scmp.eq.s32.totalorder %s23, 3
      %p116 = scmp.ne.s32.totalorder %s111, %s113
      %p117 = scmp.eq.s32.totalorder %s23, 0
      %p118 = por %p116, %p117
      %p119 = scmp.ne.s32.totalorder %s111, %s113
      %p120 = scmp.eq.s32.totalorder %s28, 3
      %p121 = por %p119, %p120
      %p122 = scmp.ne.s32.totalorder %s113, %s114
      %p123 = scmp.eq.s32.totalorder %s28, 0
      %p124 = por %p122, %p123
      %p125 = scmp.ne.s32.totalorder %s113, %s114
      %p126 = scmp.eq.s32.totalorder %s29, 3
      %p127 = por %p125, %p126
      %p129 = scmp.ne.s32.totalorder %s114, %s128
      %p130 = scmp.eq.s32.totalorder %s29, 0
      %p131 = por %p129, %p130
      %s132 = ssub.s32 %s31, %s38
      %p133 = scmp.eq.s32.totalorder %s132, 0
      %s135 = sadd.s32 %s134, 1
      %s136 = scalar_select %p133, %s134, %s135
      %p139 = pneg %p133
      %p140 = scmp.eq.s32.totalorder %s23, 3
      %p141 = por %p139, %p140
      %p142 = scmp.ne.s32.totalorder %s134, %s137
      %p143 = scmp.eq.s32.totalorder %s23, 0
      %p144 = por %p142, %p143
      %p145 = scmp.ne.s32.totalorder %s134, %s137
      %p146 = scmp.eq.s32.totalorder %s28, 3
      %p147 = por %p145, %p146
      %p148 = scmp.ne.s32.totalorder %s137, %s138
      %p149 = scmp.eq.s32.totalorder %s28, 0
      %p150 = por %p148, %p149
      %p151 = scmp.ne.s32.totalorder %s137, %s138
      %p152 = scmp.eq.s32.totalorder %s29, 3
      %p153 = por %p151, %p152
      %p155 = scmp.ne.s32.totalorder %s138, %s154
      %p156 = scmp.eq.s32.totalorder %s29, 0
      %p157 = por %p155, %p156
      %s158 = ssub.s32 %s31, %s38
      %p159 = scmp.eq.s32.totalorder %s158, 0
      %s161 = sadd.s32 %s160, 1
      %s162 = scalar_select %p159, %s160, %s161
      %p165 = pneg %p159
      %p166 = scmp.eq.s32.totalorder %s23, 3
      %p167 = por %p165, %p166
      %p168 = scmp.ne.s32.totalorder %s160, %s163
      %p169 = scmp.eq.s32.totalorder %s23, 0
      %p170 = por %p168, %p169
      %p171 = scmp.ne.s32.totalorder %s160, %s163
      %p172 = scmp.eq.s32.totalorder %s28, 3
      %p173 = por %p171, %p172
      %p174 = scmp.ne.s32.totalorder %s163, %s164
      %p175 = scmp.eq.s32.totalorder %s28, 0
      %p176 = por %p174, %p175
      %p177 = scmp.ne.s32.totalorder %s163, %s164
      %p178 = scmp.eq.s32.totalorder %s29, 3
      %p179 = por %p177, %p178
      %p181 = scmp.ne.s32.totalorder %s164, %s180
      %p182 = scmp.eq.s32.totalorder %s29, 0
      %p183 = por %p181, %p182
      %s184 = ssub.s32 %s31, %s38
      %p185 = scmp.eq.s32.totalorder %s184, 0
      %s187 = sadd.s32 %s186, 1
      %s188 = scalar_select %p185, %s186, %s187
      %p191 = pneg %p185
      %p192 = scmp.eq.s32.totalorder %s23, 3
      %p193 = por %p191, %p192
      %p194 = scmp.ne.s32.totalorder %s186, %s189
      %p195 = scmp.eq.s32.totalorder %s23, 0
      %p196 = por %p194, %p195
      %p197 = scmp.ne.s32.totalorder %s186, %s189
      %p198 = scmp.eq.s32.totalorder %s28, 3
      %p199 = por %p197, %p198
      %p200 = scmp.ne.s32.totalorder %s189, %s190
      %p201 = scmp.eq.s32.totalorder %s28, 0
      %p202 = por %p200, %p201
      %p203 = scmp.ne.s32.totalorder %s189, %s190
      %p204 = scmp.eq.s32.totalorder %s29, 3
      %p205 = por %p203, %p204
      %p207 = scmp.ne.s32.totalorder %s190, %s206
      %p208 = scmp.eq.s32.totalorder %s29, 0
      %p209 = por %p207, %p208
      %s210 = ssub.s32 %s31, %s38
      %p211 = scmp.eq.s32.totalorder %s210, 0
      %s213 = sadd.s32 %s212, 1
      %s214 = scalar_select %p211, %s212, %s213
      %p217 = pneg %p211
      %p218 = scmp.eq.s32.totalorder %s23, 3
      %p219 = por %p217, %p218
      %p220 = scmp.ne.s32.totalorder %s212, %s215
      %p221 = scmp.eq.s32.totalorder %s23, 0
      %p222 = por %p220, %p221
      %p223 = scmp.ne.s32.totalorder %s212, %s215
      %p224 = scmp.eq.s32.totalorder %s28, 3
      %p225 = por %p223, %p224
      %p226 = scmp.ne.s32.totalorder %s215, %s216
      %p227 = scmp.eq.s32.totalorder %s28, 0
      %p228 = por %p226, %p227
      %p229 = scmp.ne.s32.totalorder %s215, %s216
      %p230 = scmp.eq.s32.totalorder %s29, 3
      %p231 = por %p229, %p230
      %p233 = scmp.ne.s32.totalorder %s216, %s232
      %p234 = scmp.eq.s32.totalorder %s29, 0
      %p235 = por %p233, %p234
      %s236 = ssub.s32 %s31, %s38
      %p237 = scmp.eq.s32.totalorder %s236, 0
      %s239 = sadd.s32 %s238, 1
      %s240 = scalar_select %p237, %s238, %s239
      %p243 = pneg %p237
      %p244 = scmp.eq.s32.totalorder %s23, 3
      %p245 = por %p243, %p244
      %p246 = scmp.ne.s32.totalorder %s238, %s241
      %p247 = scmp.eq.s32.totalorder %s23, 0
      %p248 = por %p246, %p247
      %p249 = scmp.ne.s32.totalorder %s238, %s241
      %p250 = scmp.eq.s32.totalorder %s28, 3
      %p251 = por %p249, %p250
      %p252 = scmp.ne.s32.totalorder %s241, %s242
      %p253 = scmp.eq.s32.totalorder %s28, 0
      %p254 = por %p252, %p253
      %p255 = scmp.ne.s32.totalorder %s241, %s242
      %p256 = scmp.eq.s32.totalorder %s29, 3
      %p257 = por %p255, %p256
      %p259 = scmp.ne.s32.totalorder %s242, %s258
      %p260 = scmp.eq.s32.totalorder %s29, 0
      %p261 = por %p259, %p260
      %s262 = ssub.s32 %s31, %s38
      %p263 = scmp.eq.s32.totalorder %s262, 0
      %s265 = sadd.s32 %s264, 1
      %s266 = scalar_select %p263, %s264, %s265
      %p269 = pneg %p263
      %p270 = scmp.eq.s32.totalorder %s23, 3
      %p271 = por %p269, %p270
      %p272 = scmp.ne.s32.totalorder %s264, %s267
      %p273 = scmp.eq.s32.totalorder %s23, 0
      %p274 = por %p272, %p273
      %p275 = scmp.ne.s32.totalorder %s264, %s267
      %p276 = scmp.eq.s32.totalorder %s28, 3
      %p277 = por %p275, %p276
      %p278 = scmp.ne.s32.totalorder %s267, %s268
      %p279 = scmp.eq.s32.totalorder %s28, 0
      %p280 = por %p278, %p279
      %p281 = scmp.ne.s32.totalorder %s267, %s268
      %p282 = scmp.eq.s32.totalorder %s29, 3
      %p283 = por %p281, %p282
      %p285 = scmp.ne.s32.totalorder %s268, %s284
      %p286 = scmp.eq.s32.totalorder %s29, 0
      %p287 = por %p285, %p286
      %s288 = ssub.s32 %s30, %s42
      %p289 = scmp.eq.s32.totalorder %s288, 0
      %s291 = sadd.s32 %s290, 1
      %s292 = scalar_select %p289, %s290, %s291
      %p295 = pneg %p289
      %p296 = scmp.eq.s32.totalorder %s23, 3
      %p297 = por %p295, %p296
      %p298 = scmp.ne.s32.totalorder %s290, %s293
      %p299 = scmp.eq.s32.totalorder %s23, 0
      %p300 = por %p298, %p299
      %p301 = scmp.ne.s32.totalorder %s290, %s293
      %p302 = scmp.eq.s32.totalorder %s28, 3
      %p303 = por %p301, %p302
      %p304 = scmp.ne.s32.totalorder %s293, %s294
      %p305 = scmp.eq.s32.totalorder %s28, 0
      %p306 = por %p304, %p305
      %p307 = scmp.ne.s32.totalorder %s293, %s294
      %p308 = scmp.eq.s32.totalorder %s29, 3
      %p309 = por %p307, %p308
      %p311 = scmp.ne.s32.totalorder %s294, %s310
      %p312 = scmp.eq.s32.totalorder %s29, 0
      %p313 = por %p311, %p312
      %p314 = scmp.le.s32.totalorder 1, %s23
      %p315 = scmp.lt.s32.totalorder %s23, 5
      %p316 = pnand %p314, %p315
      %p317 = pneg %p316
      // Predicated region
      $region9: #{tpu_custom_call.1} parent=5 // pred_check
        _
      $region10: #{tpu_custom_call.1} parent=5 // pred_check_branch
        %319 = sbr.rel (%p316) target = $region12
      $region11: #{tpu_custom_call.1} parent=5 // pred_region
        %s320 = ssub.s32 %s23, 1
        // Predicated region
        $region13: #{tpu_custom_call.1} parent=11 // pred_check
          %p321 = pneg %p82
        $region14: #{tpu_custom_call.1} parent=11 // pred_check_branch
          %323 = sbr.rel (%p321) target = $region16
        $region15: #{tpu_custom_call.1} parent=11 // pred_region
          _
        $region16: #{tpu_custom_call.1} parent=11 // pred_fallthru
          _
        // Predicated region
        $region17: #{tpu_custom_call.1} parent=11 // pred_check
          %p324 = pneg %p103
        $region18: #{tpu_custom_call.1} parent=11 // pred_check_branch
          %326 = sbr.rel (%p324) target = $region20
        $region19: #{tpu_custom_call.1} parent=11 // pred_region
          %s328 = ssub.s32 128, 128
          %329 = vsyncadd [#allocation8], %s328
          %s331 = sshll.u32 [#allocation7], 4
          %s332 = int_to_ptr.vmem [resolvable:$true] %s331
          %334 = dma.hbm_to_vmem [thread:$0]  %s2, 128, %s332, [#allocation8]
        $region20: #{tpu_custom_call.1} parent=11 // pred_fallthru
          _
        // Predicated region
        $region21: #{tpu_custom_call.1} parent=11 // pred_check
          %p335 = pneg %p124
        $region22: #{tpu_custom_call.1} parent=11 // pred_check_branch
          %337 = sbr.rel (%p335) target = $region24
        $region23: #{tpu_custom_call.1} parent=11 // pred_region
          %s339 = ssub.s32 128, 128
          %340 = vsyncadd [#allocation8], %s339
          %s342 = sshll.u32 [#allocation9], 4
          %s343 = int_to_ptr.vmem [resolvable:$true] %s342
          %345 = dma.hbm_to_vmem [thread:$0]  %s3, 128, %s343, [#allocation8]
        $region24: #{tpu_custom_call.1} parent=11 // pred_fallthru
          _
      $region12: #{tpu_custom_call.1} parent=5 // pred_fallthru
        _
      %p346 = scmp.lt.s32.totalorder %s23, 4
      // Predicated region
      $region25: #{tpu_custom_call.1} parent=5 // pred_check
        %p347 = pneg %p346
      $region26: #{tpu_custom_call.1} parent=5 // pred_check_branch
        %349 = sbr.rel (%p347) target = $region28
      $region27: #{tpu_custom_call.1} parent=5 // pred_region
        // Predicated region
        $region29: #{tpu_custom_call.1} parent=27 // pred_check
          %p350 = pneg %p55
        $region30: #{tpu_custom_call.1} parent=27 // pred_check_branch
          %352 = sbr.rel (%p350) target = $region32
        $region31: #{tpu_custom_call.1} parent=27 // pred_region
          %s353 = sand.u32 %s45, 1
          %s354 = scalar_lea.sflag [#allocation5], %s353
          %s355 = sand.u32 %s45, 1
          %s356 = smul.addr %s355, 8
          %s357 = scalar_lea.vmem [#allocation4], %s356
          %s359 = ssub.s32 128, 128
          %360 = vsyncadd %s354, %s359
          %s361 = smul.addr %s30, 128
          %s362 = scalar_lea.hbm %s0, %s361
          %s364 = sshll.u32 %s357, 4
          %s365 = int_to_ptr.vmem [resolvable:$true] %s364
          %367 = dma.hbm_to_vmem [thread:$0]  %s362, 128, %s365, %s354
        $region32: #{tpu_custom_call.1} parent=27 // pred_fallthru
          _
        // Predicated region
        $region33: #{tpu_custom_call.1} parent=27 // pred_check
          %p368 = pneg %p144
        $region34: #{tpu_custom_call.1} parent=27 // pred_check_branch
          %370 = sbr.rel (%p368) target = $region36
        $region35: #{tpu_custom_call.1} parent=27 // pred_region
          %p371 = scmp.lt.s32.totalorder %s31, 1
          %s372 = scalar_select %p371, %s31, 1
          %s373 = scalar_lea.vmem %s4, %s372
        $region36: #{tpu_custom_call.1} parent=27 // pred_fallthru
          _
        // Predicated region
        $region37: #{tpu_custom_call.1} parent=27 // pred_check
          %p374 = pneg %p170
        $region38: #{tpu_custom_call.1} parent=27 // pred_check_branch
          %376 = sbr.rel (%p374) target = $region40
        $region39: #{tpu_custom_call.1} parent=27 // pred_region
          %p377 = scmp.lt.s32.totalorder %s31, 1
          %s378 = scalar_select %p377, %s31, 1
          %s379 = smul.addr %s378, 8
          %s380 = smul.addr %s379, 4
          %s381 = scalar_lea.vmem %s5, %s380
        $region40: #{tpu_custom_call.1} parent=27 // pred_fallthru
          _
        // Predicated region
        $region41: #{tpu_custom_call.1} parent=27 // pred_check
          %p382 = pneg %p196
        $region42: #{tpu_custom_call.1} parent=27 // pred_check_branch
          %384 = sbr.rel (%p382) target = $region44
        $region43: #{tpu_custom_call.1} parent=27 // pred_region
          %p385 = scmp.lt.s32.totalorder %s31, 1
          %s386 = scalar_select %p385, %s31, 1
          %s387 = smul.addr %s386, 8
          %s388 = smul.addr %s387, 4
          %s389 = scalar_lea.vmem %s6, %s388
        $region44: #{tpu_custom_call.1} parent=27 // pred_fallthru
          _
        // Predicated region
        $region45: #{tpu_custom_call.1} parent=27 // pred_check
          %p390 = pneg %p222
        $region46: #{tpu_custom_call.1} parent=27 // pred_check_branch
          %392 = sbr.rel (%p390) target = $region48
        $region47: #{tpu_custom_call.1} parent=27 // pred_region
          %p393 = scmp.lt.s32.totalorder %s31, 1
          %s394 = scalar_select %p393, %s31, 1
          %s395 = scalar_lea.vmem %s7, %s394
        $region48: #{tpu_custom_call.1} parent=27 // pred_fallthru
          _
        // Predicated region
        $region49: #{tpu_custom_call.1} parent=27 // pred_check
          %p396 = pneg %p248
        $region50: #{tpu_custom_call.1} parent=27 // pred_check_branch
          %398 = sbr.rel (%p396) target = $region52
        $region51: #{tpu_custom_call.1} parent=27 // pred_region
          %p399 = scmp.lt.s32.totalorder %s31, 1
          %s400 = scalar_select %p399, %s31, 1
          %s401 = smul.addr %s400, 24
          %s402 = smul.addr %s401, 4
          %s403 = scalar_lea.vmem %s8, %s402
        $region52: #{tpu_custom_call.1} parent=27 // pred_fallthru
          _
        // Predicated region
        $region53: #{tpu_custom_call.1} parent=27 // pred_check
          %p404 = pneg %p274
        $region54: #{tpu_custom_call.1} parent=27 // pred_check_branch
          %406 = sbr.rel (%p404) target = $region56
        $region55: #{tpu_custom_call.1} parent=27 // pred_region
          %p407 = scmp.lt.s32.totalorder %s31, 1
          %s408 = scalar_select %p407, %s31, 1
          %s409 = smul.addr %s408, 24
          %s410 = smul.addr %s409, 4
          %s411 = scalar_lea.vmem %s9, %s410
        $region56: #{tpu_custom_call.1} parent=27 // pred_fallthru
          _
      $region28: #{tpu_custom_call.1} parent=5 // pred_fallthru
        _
      %p412 = scmp.le.s32.totalorder 1, %s23
      %p413 = scmp.lt.s32.totalorder %s23, 5
      %p414 = pnand %p412, %p413
      %p415 = pneg %p414
      // Predicated region
      $region57: #{tpu_custom_call.1} parent=5 // pred_check
        _
      $region58: #{tpu_custom_call.1} parent=5 // pred_check_branch
        %417 = sbr.rel (%p414) target = $region60
      $region59: #{tpu_custom_call.1} parent=5 // pred_region
        %s418 = ssub.s32 %s23, 1
        %s419 = sand.u32 %s48, 1
        %s420 = scalar_lea.sflag [#allocation5], %s419
        %s421 = sand.u32 %s48, 1
        %s422 = smul.addr %s421, 8
        %s423 = scalar_lea.vmem [#allocation4], %s422
        // Predicated region
        $region61: #{tpu_custom_call.1} parent=59 // pred_check
          %p424 = pneg %p61
        $region62: #{tpu_custom_call.1} parent=59 // pred_check_branch
          %426 = sbr.rel (%p424) target = $region64
        $region63: #{tpu_custom_call.1} parent=59 // pred_region
          %427 = dma.done %s420, 128
        $region64: #{tpu_custom_call.1} parent=59 // pred_fallthru
          _
        // Predicated region
        $region65: #{tpu_custom_call.1} parent=59 // pred_check
          %p428 = pneg %p103
        $region66: #{tpu_custom_call.1} parent=59 // pred_check_branch
          %430 = sbr.rel (%p428) target = $region68
        $region67: #{tpu_custom_call.1} parent=59 // pred_region
          %431 = dma.done [#allocation8], 128
        $region68: #{tpu_custom_call.1} parent=59 // pred_fallthru
          _
        // Predicated region
        $region69: #{tpu_custom_call.1} parent=59 // pred_check
          %p432 = pneg %p124
        $region70: #{tpu_custom_call.1} parent=59 // pred_check_branch
          %434 = sbr.rel (%p432) target = $region72
        $region71: #{tpu_custom_call.1} parent=59 // pred_region
          %435 = dma.done [#allocation8], 128
        $region72: #{tpu_custom_call.1} parent=59 // pred_fallthru
          _
        %s436 = sand.u32 %s48, 1
        %s437 = scalar_lea.sflag [#allocation5], %s436
        %s438 = sand.u32 %s48, 1
        %s439 = smul.addr %s438, 8
        %s440 = scalar_lea.vmem [#allocation4], %s439
        %p441 = pneg %p61
        %p442 = pneg %p58
        %p443 = pneg %p82
        %p444 = pneg %p79
        %p445 = pneg %p103
        %p446 = pneg %p100
        %p447 = pneg %p124
        %p448 = pneg %p121
        %p449 = scmp.lt.s32.totalorder %s33, 1
        %s450 = scalar_select %p449, %s33, 1
        %s451 = scalar_lea.vmem %s4, %s450
        %p452 = pneg %p150
        %p453 = pneg %p147
        %p454 = scmp.lt.s32.totalorder %s33, 1
        %s455 = scalar_select %p454, %s33, 1
        %s456 = smul.addr %s455, 8
        %s457 = smul.addr %s456, 4
        %s458 = scalar_lea.vmem %s5, %s457
        %p459 = pneg %p176
        %p460 = pneg %p173
        %p461 = scmp.lt.s32.totalorder %s33, 1
        %s462 = scalar_select %p461, %s33, 1
        %s463 = smul.addr %s462, 8
        %s464 = smul.addr %s463, 4
        %s465 = scalar_lea.vmem %s6, %s464
        %p466 = pneg %p202
        %p467 = pneg %p199
        %p468 = scmp.lt.s32.totalorder %s33, 1
        %s469 = scalar_select %p468, %s33, 1
        %s470 = scalar_lea.vmem %s7, %s469
        %p471 = pneg %p228
        %p472 = pneg %p225
        %p473 = scmp.lt.s32.totalorder %s33, 1
        %s474 = scalar_select %p473, %s33, 1
        %s475 = smul.addr %s474, 24
        %s476 = smul.addr %s475, 4
        %s477 = scalar_lea.vmem %s8, %s476
        %p478 = pneg %p254
        %p479 = pneg %p251
        %p480 = scmp.lt.s32.totalorder %s33, 1
        %s481 = scalar_select %p480, %s33, 1
        %s482 = smul.addr %s481, 24
        %s483 = smul.addr %s482, 4
        %s484 = scalar_lea.vmem %s9, %s483
        %p485 = pneg %p280
        %p486 = pneg %p277
        %p487 = pneg %p306
        %p488 = pneg %p303
        %s489 = sand.u32 %s293, 1
        %s490 = scalar_lea.sflag [#allocation6], %s489
        %s491 = sand.u32 %s293, 1
        %s492 = smul.addr %s491, 8
        %s493 = scalar_lea.vmem [#allocation10], %s492
        %p494 = scmp.lt.s32.totalorder %s33, 1
        %s495 = scalar_select %p494, %s33, 1
        %s496 = scalar_lea.vmem %s4, %s495
        %p497 = scmp.lt.s32.totalorder %s33, 1
        %s498 = scalar_select %p497, %s33, 1
        %s499 = smul.addr %s498, 8
        %s500 = smul.addr %s499, 4
        %s501 = scalar_lea.vmem %s5, %s500
        %p502 = scmp.lt.s32.totalorder %s33, 1
        %s503 = scalar_select %p502, %s33, 1
        %s504 = smul.addr %s503, 8
        %s505 = smul.addr %s504, 4
        %s506 = scalar_lea.vmem %s6, %s505
        %p507 = scmp.lt.s32.totalorder %s33, 1
        %s508 = scalar_select %p507, %s33, 1
        %s509 = scalar_lea.vmem %s7, %s508
        %p510 = scmp.lt.s32.totalorder %s33, 1
        %s511 = scalar_select %p510, %s33, 1
        %s512 = smul.addr %s511, 24
        %s513 = smul.addr %s512, 4
        %s514 = scalar_lea.vmem %s8, %s513
        %p515 = scmp.lt.s32.totalorder %s33, 1
        %s516 = scalar_select %p515, %s33, 1
        %s517 = smul.addr %s516, 24
        %s518 = smul.addr %s517, 4
        %s519 = scalar_lea.vmem %s9, %s518
        %p521 = scmp.eq.s32.totalorder %s33, 0
        // Predicated region
        $region73: #{tpu_custom_call.1} parent=59 // pred_check
          %p522 = pneg %p521
        $region74: #{tpu_custom_call.1} parent=59 // pred_check_branch
          %524 = sbr.rel (%p522) target = $region76
        $region75: #{tpu_custom_call.1} parent=59 // pred_region
          %v525 = vld [vmem:[%s423] sm:$0xff]
          %vm526 = vcmask 523264
          %527 = vst.msk [vmem:[#allocation2] sm:$0xff] %vm526, %v525
        $region76: #{tpu_custom_call.1} parent=59 // pred_fallthru
          _
        %v528 = vld [vmem:[#allocation2] sm:$0xff]
        %v529 = vld [vmem:[%s496] sm:$0x1]
        %v530 = vmul.f32 %v528, %v528
        %vm531 = vcmask 523264
        %v532 = vsel %vm531, %v530, 0.0
        %533 = vadd.xlane.f32.xlu0 %v532
        %v534 = vpop.xlane.xlu0 %533
        %v535 = vrcp.pop 64.0
        %v536 = vmul.f32 %v534, %v535
        %v537 = vadd.f32 %v536, 1e-06
        %v538 = vrsqrt.pop %v537
        %v539 = vmul.f32 %v528, %v538
        %v541 = vlaneseq
        %v542 = vshrl.u32 %v541, 7
        %v543 = vsub.s32 0, %v542
        %v544 = vrot.slane %v529, %v543
        %v546 = vmul.f32 %v539, %v544
        %v547 = vpack.c.bf16 %v546, %v546
        %v548 = vld [vmem:[%s501] sm:$0xf]
        %v549 = vld [vmem:[%s501 + $0x4] sm:$0xf]
        %v550 = vld [vmem:[%s501 + $0x8] sm:$0xf]
        %v551 = vld [vmem:[%s501 + $0xc] sm:$0xf]
        %v552 = vld [vmem:[%s501 + $0x10] sm:$0xf]
        %v553 = vld [vmem:[%s501 + $0x14] sm:$0xf]
        %v554 = vld [vmem:[%s501 + $0x18] sm:$0xf]
        %v555 = vld [vmem:[%s501 + $0x1c] sm:$0xf]
        %v564 = vunpack.c.l.b16 %v548
        %v565 = vunpack.c.l.b16 %v549
        %v566 = vunpack.c.l.b16 %v550
        %v567 = vunpack.c.l.b16 %v551
        %v568 = vunpack.c.l.b16 %v552
        %v569 = vunpack.c.l.b16 %v553
        %v570 = vunpack.c.l.b16 %v554
        %v571 = vunpack.c.l.b16 %v555
        %v572 = vpack.c.b16 %v565, %v564
        %v573 = vpack.c.b16 %v567, %v566
        %v574 = vpack.c.b16 %v569, %v568
        %v575 = vpack.c.b16 %v571, %v570
        %v581 = vsel %vm531, %v547, 0
        %583 = vmatprep.subr.bf16.mxu0 0
        %584 = vmatpush1.bf16.msra.mxu0 0
        %585 = vmatprep.subr.bf16.mxu0 0
        %586 = vmatpush1.bf16.msra.mxu0 0
        %587 = vmatprep.subr.bf16.mxu0 0
        %588 = vmatpush1.bf16.msra.mxu0 0
        %589 = vmatprep.subr.bf16.mxu0 0
        %590 = vmatpush1.bf16.msra.mxu0 0
        %591 = vmatprep.subr.bf16.mxu0 0
        %592 = vmatpush1.bf16.msra.mxu0 %v575
        %593 = vmatprep.subr.bf16.mxu0 0
        %594 = vmatpush1.bf16.msra.mxu0 %v574
        %595 = vmatprep.subr.bf16.mxu0 0
        %596 = vmatpush1.bf16.msra.mxu0 %v573
        %597 = vmatprep.subr.bf16.mxu0 0
        %598 = vmatpush1.bf16.msra.mxu0 %v572
        %599 = vmatprep.subr.bf16.mxu0 0
        %600 = vmatpush2.bf16.msra.mxu0 0
        %601 = vmatprep.subr.bf16.mxu0 0
        %602 = vmatpush2.bf16.msra.mxu0 0
        %603 = vmatprep.subr.bf16.mxu0 0
        %604 = vmatpush2.bf16.msra.mxu0 0
        %605 = vmatprep.subr.bf16.mxu0 0
        %606 = vmatpush2.bf16.msra.mxu0 0
        %607 = vmatprep.subr.bf16.mxu0 0
        %608 = vmatpush2.bf16.msra.mxu0 0
        %609 = vmatprep.subr.bf16.mxu0 0
        %610 = vmatpush2.bf16.msra.mxu0 0
        %611 = vmatprep.subr.bf16.mxu0 0
        %612 = vmatpush2.bf16.msra.mxu0 0
        %613 = vmatprep.subr.bf16.mxu0 0
        %614 = vmatpush2.bf16.msra.mxu0 0
        %615 = vmatprep.mubr.bf16.mxu0 0
        %616 = vmatmul.mubr.bf16.gmra.mxu0 %v581
        %v617 = vpop.f32.mrf.mxu0
        %v618 = vadd.f32 0.0, %v617
        %v619 = vpop.f32.mrf.mxu0
        %v620 = vpop.f32.mrf.mxu0
        %v621 = vpop.f32.mrf.mxu0
        %622 = vdwg.mxu0
        %v623 = vld [vmem:[%s1] sm:$0xff]
        %v624 = vld [vmem:[#allocation7] sm:$0xff]
        %v625 = vld [vmem:[#allocation9] sm:$0xff]
        %627 = vrot.lane.b32.xlu0 %v618, 127
        %v628 = vpop.permute.xlu0 %627
        %630 = vrot.lane.b32.xlu0 %v618, 63
        %v631 = vpop.permute.xlu0 %630
        %vm633 = vcmask 515072
        %v634 = vsel %vm633, %v628, %v631
        %635 = vrot.lane.b32.xlu0 %v618, 65
        %v636 = vpop.permute.xlu0 %635
        %638 = vrot.lane.b32.xlu0 %v618, 1
        %v639 = vpop.permute.xlu0 %638
        %vm641 = vcmask 7168
        %v642 = vsel %vm641, %v636, %v639
        %v643 = vmul.f32 %v618, %v623
        %v644 = vmul.f32 %v634, %v624
        %v645 = vadd.f32 %v643, %v644
        %v646 = vmul.f32 %v642, %v625
        %v647 = vadd.f32 %v645, %v646
        %648 = vrot.lane.b32.xlu0 %v618, 95
        %v649 = vpop.permute.xlu0 %648
        %vm651 = vcmask 252928
        %v652 = vsel %vm651, %v631, %v649
        %653 = vrot.lane.b32.xlu0 %v618, 33
        %v654 = vpop.permute.xlu0 %653
        %v656 = vsel %vm641, %v654, %v636
        %658 = vrot.lane.b32.xlu0 %v623, 64
        %v659 = vpop.permute.xlu0 %658
        %v661 = vmul.f32 %v618, %v659
        %v662 = vmul.f32 %v652, %v624
        %664 = vrot.lane.b32.xlu0 %v662, 64
        %v665 = vpop.permute.xlu0 %664
        %v667 = vadd.f32 %v661, %v665
        %v668 = vmul.f32 %v656, %v625
        %670 = vrot.lane.b32.xlu0 %v668, 64
        %v671 = vpop.permute.xlu0 %670
        %v673 = vadd.f32 %v667, %v671
        %v674 = vlaneseq
        %v675 = vshrl.u32 %v674, 7
        %v676 = vlaneseq
        %v677 = vand.u32 %v676, 127
        %vm678 = vcmp.le.s32.totalorder %v677, %v675
        %v679 = vsel %vm678, 0.0, -1e+30
        %681 = vrot.lane.b32.xlu0 %v673, 64
        %v682 = vpop.permute.xlu0 %681
        %vm683 = vcmask 130048
        %v685 = vsel %vm683, %v647, 0
        %v687 = vsel %vm683, %v682, 0
        %689 = vmatprep.subr.mxu0 0.0
        %690 = vmatpush1.xpose.msra.mxu0 0.0
        %691 = vmatprep.subr.mxu0 0.0
        %692 = vmatpush1.xpose.msra.mxu0 0.0
        %693 = vmatprep.subr.mxu0 0.0
        %694 = vmatpush1.xpose.msra.mxu0 0.0
        %695 = vmatprep.subr.mxu0 0.0
        %696 = vmatpush1.xpose.msra.mxu0 0.0
        %697 = vmatprep.subr.mxu0 0.0
        %698 = vmatpush1.xpose.msra.mxu0 0.0
        %699 = vmatprep.subr.mxu0 0.0
        %700 = vmatpush1.xpose.msra.mxu0 0.0
        %701 = vmatprep.subr.mxu0 0.0
        %702 = vmatpush1.xpose.msra.mxu0 0.0
        %703 = vmatprep.subr.mxu0 0.0
        %704 = vmatpush1.xpose.msra.mxu0 0.0
        %705 = vmatprep.subr.mxu0 0.0
        %706 = vmatpush1.xpose.msra.mxu0 0.0
        %707 = vmatprep.subr.mxu0 0.0
        %708 = vmatpush1.xpose.msra.mxu0 0.0
        %709 = vmatprep.subr.mxu0 0.0
        %710 = vmatpush1.xpose.msra.mxu0 0.0
        %711 = vmatprep.subr.mxu0 0.0
        %712 = vmatpush1.xpose.msra.mxu0 0.0
        %713 = vmatprep.subr.mxu0 0.0
        %714 = vmatpush1.xpose.msra.mxu0 0.0
        %715 = vmatprep.subr.mxu0 0.0
        %716 = vmatpush1.xpose.msra.mxu0 0.0
        %717 = vmatprep.subr.mxu0 0.0
        %718 = vmatpush1.xpose.msra.mxu0 0.0
        %719 = vmatprep.subr.mxu0 0.0
        %720 = vmatpush1.xpose.msra.mxu0 %v687
        %721 = vmatprep.subr.mxu0 0.0
        %722 = vmatpush2.xpose.msra.mxu0 0.0
        %723 = vmatprep.subr.mxu0 0.0
        %724 = vmatpush2.xpose.msra.mxu0 0.0
        %725 = vmatprep.subr.mxu0 0.0
        %726 = vmatpush2.xpose.msra.mxu0 0.0
        %727 = vmatprep.subr.mxu0 0.0
        %728 = vmatpush2.xpose.msra.mxu0 0.0
        %729 = vmatprep.subr.mxu0 0.0
        %730 = vmatpush2.xpose.msra.mxu0 0.0
        %731 = vmatprep.subr.mxu0 0.0
        %732 = vmatpush2.xpose.msra.mxu0 0.0
        %733 = vmatprep.subr.mxu0 0.0
        %734 = vmatpush2.xpose.msra.mxu0 0.0
        %735 = vmatprep.subr.mxu0 0.0
        %736 = vmatpush2.xpose.msra.mxu0 0.0
        %737 = vmatprep.subr.mxu0 0.0
        %738 = vmatpush2.xpose.msra.mxu0 0.0
        %739 = vmatprep.subr.mxu0 0.0
        %740 = vmatpush2.xpose.msra.mxu0 0.0
        %741 = vmatprep.subr.mxu0 0.0
        %742 = vmatpush2.xpose.msra.mxu0 0.0
        %743 = vmatprep.subr.mxu0 0.0
        %744 = vmatpush2.xpose.msra.mxu0 0.0
        %745 = vmatprep.subr.mxu0 0.0
        %746 = vmatpush2.xpose.msra.mxu0 0.0
        %747 = vmatprep.subr.mxu0 0.0
        %748 = vmatpush2.xpose.msra.mxu0 0.0
        %749 = vmatprep.subr.mxu0 0.0
        %750 = vmatpush2.xpose.msra.mxu0 0.0
        %751 = vmatprep.subr.mxu0 0.0
        %752 = vmatpush2.xpose.msra.mxu0 0.0
        %753 = vmatprep.mubr.f32.mxu0 0.0
        %754 = vmatmul.mubr.f32.gmra.mxu0 %v685
        %v755 = vpop.f32.mrf.mxu0
        %v756 = vadd.f32 %v679, %v755
        %v757 = vpop.f32.mrf.mxu0
        %758 = vdwg.mxu0
        %vm759 = vcmask 64512
        %v760 = vsel %vm759, %v756, -inf
        %761 = vmax.xlane.f32.xlu0 %v760
        %v762 = vpop.xlane.xlu0 %761
        %v763 = vsub.f32 %v756, %v762
        %v764 = vmul.f32 %v763, 1.442695
        %v765 = vpow.pop %v764
        %v766 = vsel %vm759, %v765, 0.0
        %767 = vadd.xlane.f32.xlu0 %v766
        %v768 = vpop.xlane.xlu0 %767
        %769 = vrot.lane.b32.xlu0 %v618, 32
        %v770 = vpop.permute.xlu0 %769
        %v773 = vsel %vm759, %v765, 0
        %775 = vmatprep.subr.mxu0 0.0
        %776 = vmatpush1.msra.mxu0 0.0
        %777 = vmatprep.subr.mxu0 0.0
        %778 = vmatpush1.msra.mxu0 0.0
        %779 = vmatprep.subr.mxu0 0.0
        %780 = vmatpush1.msra.mxu0 0.0
        %781 = vmatprep.subr.mxu0 0.0
        %782 = vmatpush1.msra.mxu0 0.0
        %783 = vmatprep.subr.mxu0 0.0
        %784 = vmatpush1.msra.mxu0 0.0
        %785 = vmatprep.subr.mxu0 0.0
        %786 = vmatpush1.msra.mxu0 0.0
        %787 = vmatprep.subr.mxu0 0.0
        %788 = vmatpush1.msra.mxu0 0.0
        %789 = vmatprep.subr.mxu0 0.0
        %790 = vmatpush1.msra.mxu0 0.0
        %791 = vmatprep.subr.mxu0 0.0
        %792 = vmatpush1.msra.mxu0 0.0
        %793 = vmatprep.subr.mxu0 0.0
        %794 = vmatpush1.msra.mxu0 0.0
        %795 = vmatprep.subr.mxu0 0.0
        %796 = vmatpush1.msra.mxu0 0.0
        %797 = vmatprep.subr.mxu0 0.0
        %798 = vmatpush1.msra.mxu0 0.0
        %799 = vmatprep.subr.mxu0 0.0
        %800 = vmatpush1.msra.mxu0 0.0
        %801 = vmatprep.subr.mxu0 0.0
        %802 = vmatpush1.msra.mxu0 0.0
        %803 = vmatprep.subr.mxu0 0.0
        %804 = vmatpush1.msra.mxu0 0.0
        %805 = vmatprep.subr.mxu0 0.0
        %806 = vmatpush1.msra.mxu0 %v770
        %807 = vmatprep.subr.mxu0 0.0
        %808 = vmatpush2.msra.mxu0 0.0
        %809 = vmatprep.subr.mxu0 0.0
        %810 = vmatpush2.msra.mxu0 0.0
        %811 = vmatprep.subr.mxu0 0.0
        %812 = vmatpush2.msra.mxu0 0.0
        %813 = vmatprep.subr.mxu0 0.0
        %814 = vmatpush2.msra.mxu0 0.0
        %815 = vmatprep.subr.mxu0 0.0
        %816 = vmatpush2.msra.mxu0 0.0
        %817 = vmatprep.subr.mxu0 0.0
        %818 = vmatpush2.msra.mxu0 0.0
        %819 = vmatprep.subr.mxu0 0.0
        %820 = vmatpush2.msra.mxu0 0.0
        %821 = vmatprep.subr.mxu0 0.0
        %822 = vmatpush2.msra.mxu0 0.0
        %823 = vmatprep.subr.mxu0 0.0
        %824 = vmatpush2.msra.mxu0 0.0
        %825 = vmatprep.subr.mxu0 0.0
        %826 = vmatpush2.msra.mxu0 0.0
        %827 = vmatprep.subr.mxu0 0.0
        %828 = vmatpush2.msra.mxu0 0.0
        %829 = vmatprep.subr.mxu0 0.0
        %830 = vmatpush2.msra.mxu0 0.0
        %831 = vmatprep.subr.mxu0 0.0
        %832 = vmatpush2.msra.mxu0 0.0
        %833 = vmatprep.subr.mxu0 0.0
        %834 = vmatpush2.msra.mxu0 0.0
        %835 = vmatprep.subr.mxu0 0.0
        %836 = vmatpush2.msra.mxu0 0.0
        %837 = vmatprep.subr.mxu0 0.0
        %838 = vmatpush2.msra.mxu0 0.0
        %839 = vmatprep.mubr.f32.mxu0 0.0
        %840 = vmatmul.mubr.f32.gmra.mxu0 %v773
        %v841 = vpop.f32.mrf.mxu0
        %v842 = vadd.f32 0.0, %v841
        %v843 = vpop.f32.mrf.mxu0
        %844 = vdwg.mxu0
        %v845 = vrcp.pop %v768
        %v846 = vmul.f32 %v842, %v845
        %847 = vst.msk [vmem:[#allocation3] sm:$0xff] %vm683, %v846
        %848 = vrot.lane.b32.xlu0 %v647, 112
        %v849 = vpop.permute.xlu0 %848
        %v850 = vsel %vm683, %v849, 0
        %852 = vmatprep.subr.mxu0 0.0
        %853 = vmatpush1.xpose.msra.mxu0 0.0
        %854 = vmatprep.subr.mxu0 0.0
        %855 = vmatpush1.xpose.msra.mxu0 0.0
        %856 = vmatprep.subr.mxu0 0.0
        %857 = vmatpush1.xpose.msra.mxu0 0.0
        %858 = vmatprep.subr.mxu0 0.0
        %859 = vmatpush1.xpose.msra.mxu0 0.0
        %860 = vmatprep.subr.mxu0 0.0
        %861 = vmatpush1.xpose.msra.mxu0 0.0
        %862 = vmatprep.subr.mxu0 0.0
        %863 = vmatpush1.xpose.msra.mxu0 0.0
        %864 = vmatprep.subr.mxu0 0.0
        %865 = vmatpush1.xpose.msra.mxu0 0.0
        %866 = vmatprep.subr.mxu0 0.0
        %867 = vmatpush1.xpose.msra.mxu0 0.0
        %868 = vmatprep.subr.mxu0 0.0
        %869 = vmatpush1.xpose.msra.mxu0 0.0
        %870 = vmatprep.subr.mxu0 0.0
        %871 = vmatpush1.xpose.msra.mxu0 0.0
        %872 = vmatprep.subr.mxu0 0.0
        %873 = vmatpush1.xpose.msra.mxu0 0.0
        %874 = vmatprep.subr.mxu0 0.0
        %875 = vmatpush1.xpose.msra.mxu0 0.0
        %876 = vmatprep.subr.mxu0 0.0
        %877 = vmatpush1.xpose.msra.mxu0 0.0
        %878 = vmatprep.subr.mxu0 0.0
        %879 = vmatpush1.xpose.msra.mxu0 0.0
        %880 = vmatprep.subr.mxu0 0.0
        %881 = vmatpush1.xpose.msra.mxu0 0.0
        %882 = vmatprep.subr.mxu0 0.0
        %883 = vmatpush1.xpose.msra.mxu0 %v687
        %884 = vmatprep.subr.mxu0 0.0
        %885 = vmatpush2.xpose.msra.mxu0 0.0
        %886 = vmatprep.subr.mxu0 0.0
        %887 = vmatpush2.xpose.msra.mxu0 0.0
        %888 = vmatprep.subr.mxu0 0.0
        %889 = vmatpush2.xpose.msra.mxu0 0.0
        %890 = vmatprep.subr.mxu0 0.0
        %891 = vmatpush2.xpose.msra.mxu0 0.0
        %892 = vmatprep.subr.mxu0 0.0
        %893 = vmatpush2.xpose.msra.mxu0 0.0
        %894 = vmatprep.subr.mxu0 0.0
        %895 = vmatpush2.xpose.msra.mxu0 0.0
        %896 = vmatprep.subr.mxu0 0.0
        %897 = vmatpush2.xpose.msra.mxu0 0.0
        %898 = vmatprep.subr.mxu0 0.0
        %899 = vmatpush2.xpose.msra.mxu0 0.0
        %900 = vmatprep.subr.mxu0 0.0
        %901 = vmatpush2.xpose.msra.mxu0 0.0
        %902 = vmatprep.subr.mxu0 0.0
        %903 = vmatpush2.xpose.msra.mxu0 0.0
        %904 = vmatprep.subr.mxu0 0.0
        %905 = vmatpush2.xpose.msra.mxu0 0.0
        %906 = vmatprep.subr.mxu0 0.0
        %907 = vmatpush2.xpose.msra.mxu0 0.0
        %908 = vmatprep.subr.mxu0 0.0
        %909 = vmatpush2.xpose.msra.mxu0 0.0
        %910 = vmatprep.subr.mxu0 0.0
        %911 = vmatpush2.xpose.msra.mxu0 0.0
        %912 = vmatprep.subr.mxu0 0.0
        %913 = vmatpush2.xpose.msra.mxu0 0.0
        %914 = vmatprep.subr.mxu0 0.0
        %915 = vmatpush2.xpose.msra.mxu0 0.0
        %916 = vmatprep.mubr.f32.mxu0 0.0
        %917 = vmatmul.mubr.f32.gmra.mxu0 %v850
        %v918 = vpop.f32.mrf.mxu0
        %v919 = vadd.f32 %v679, %v918
        %v920 = vpop.f32.mrf.mxu0
        %921 = vdwg.mxu0
        %v922 = vsel %vm759, %v919, -inf
        %923 = vmax.xlane.f32.xlu0 %v922
        %v924 = vpop.xlane.xlu0 %923
        %v925 = vsub.f32 %v919, %v924
        %v926 = vmul.f32 %v925, 1.442695
        %v927 = vpow.pop %v926
        %v928 = vsel %vm759, %v927, 0.0
        %929 = vadd.xlane.f32.xlu0 %v928
        %v930 = vpop.xlane.xlu0 %929
        %v932 = vsel %vm759, %v927, 0
        %934 = vmatprep.subr.mxu0 0.0
        %935 = vmatpush1.msra.mxu0 0.0
        %936 = vmatprep.subr.mxu0 0.0
        %937 = vmatpush1.msra.mxu0 0.0
        %938 = vmatprep.subr.mxu0 0.0
        %939 = vmatpush1.msra.mxu0 0.0
        %940 = vmatprep.subr.mxu0 0.0
        %941 = vmatpush1.msra.mxu0 0.0
        %942 = vmatprep.subr.mxu0 0.0
        %943 = vmatpush1.msra.mxu0 0.0
        %944 = vmatprep.subr.mxu0 0.0
        %945 = vmatpush1.msra.mxu0 0.0
        %946 = vmatprep.subr.mxu0 0.0
        %947 = vmatpush1.msra.mxu0 0.0
        %948 = vmatprep.subr.mxu0 0.0
        %949 = vmatpush1.msra.mxu0 0.0
        %950 = vmatprep.subr.mxu0 0.0
        %951 = vmatpush1.msra.mxu0 0.0
        %952 = vmatprep.subr.mxu0 0.0
        %953 = vmatpush1.msra.mxu0 0.0
        %954 = vmatprep.subr.mxu0 0.0
        %955 = vmatpush1.msra.mxu0 0.0
        %956 = vmatprep.subr.mxu0 0.0
        %957 = vmatpush1.msra.mxu0 0.0
        %958 = vmatprep.subr.mxu0 0.0
        %959 = vmatpush1.msra.mxu0 0.0
        %960 = vmatprep.subr.mxu0 0.0
        %961 = vmatpush1.msra.mxu0 0.0
        %962 = vmatprep.subr.mxu0 0.0
        %963 = vmatpush1.msra.mxu0 0.0
        %964 = vmatprep.subr.mxu0 0.0
        %965 = vmatpush1.msra.mxu0 %v770
        %966 = vmatprep.subr.mxu0 0.0
        %967 = vmatpush2.msra.mxu0 0.0
        %968 = vmatprep.subr.mxu0 0.0
        %969 = vmatpush2.msra.mxu0 0.0
        %970 = vmatprep.subr.mxu0 0.0
        %971 = vmatpush2.msra.mxu0 0.0
        %972 = vmatprep.subr.mxu0 0.0
        %973 = vmatpush2.msra.mxu0 0.0
        %974 = vmatprep.subr.mxu0 0.0
        %975 = vmatpush2.msra.mxu0 0.0
        %976 = vmatprep.subr.mxu0 0.0
        %977 = vmatpush2.msra.mxu0 0.0
        %978 = vmatprep.subr.mxu0 0.0
        %979 = vmatpush2.msra.mxu0 0.0
        %980 = vmatprep.subr.mxu0 0.0
        %981 = vmatpush2.msra.mxu0 0.0
        %982 = vmatprep.subr.mxu0 0.0
        %983 = vmatpush2.msra.mxu0 0.0
        %984 = vmatprep.subr.mxu0 0.0
        %985 = vmatpush2.msra.mxu0 0.0
        %986 = vmatprep.subr.mxu0 0.0
        %987 = vmatpush2.msra.mxu0 0.0
        %988 = vmatprep.subr.mxu0 0.0
        %989 = vmatpush2.msra.mxu0 0.0
        %990 = vmatprep.subr.mxu0 0.0
        %991 = vmatpush2.msra.mxu0 0.0
        %992 = vmatprep.subr.mxu0 0.0
        %993 = vmatpush2.msra.mxu0 0.0
        %994 = vmatprep.subr.mxu0 0.0
        %995 = vmatpush2.msra.mxu0 0.0
        %996 = vmatprep.subr.mxu0 0.0
        %997 = vmatpush2.msra.mxu0 0.0
        %998 = vmatprep.mubr.f32.mxu0 0.0
        %999 = vmatmul.mubr.f32.gmra.mxu0 %v932
        %v1000 = vpop.f32.mrf.mxu0
        %v1001 = vadd.f32 0.0, %v1000
        %v1002 = vpop.f32.mrf.mxu0
        %1003 = vdwg.mxu0
        %v1004 = vrcp.pop %v930
        %v1005 = vmul.f32 %v1001, %v1004
        %1007 = vrot.lane.b32.xlu0 %v1005, 16
        %v1008 = vpop.permute.xlu0 %1007
        %vm1010 = vcmask 261248
        %1011 = vst.msk [vmem:[#allocation3] sm:$0xff] %vm1010, %v1008
        %1012 = vrot.lane.b32.xlu0 %v647, 96
        %v1013 = vpop.permute.xlu0 %1012
        %1014 = vrot.lane.b32.xlu0 %v673, 48
        %v1015 = vpop.permute.xlu0 %1014
        %v1016 = vsel %vm683, %v1013, 0
        %v1018 = vsel %vm683, %v1015, 0
        %1020 = vmatprep.subr.mxu0 0.0
        %1021 = vmatpush1.xpose.msra.mxu0 0.0
        %1022 = vmatprep.subr.mxu0 0.0
        %1023 = vmatpush1.xpose.msra.mxu0 0.0
        %1024 = vmatprep.subr.mxu0 0.0
        %1025 = vmatpush1.xpose.msra.mxu0 0.0
        %1026 = vmatprep.subr.mxu0 0.0
        %1027 = vmatpush1.xpose.msra.mxu0 0.0
        %1028 = vmatprep.subr.mxu0 0.0
        %1029 = vmatpush1.xpose.msra.mxu0 0.0
        %1030 = vmatprep.subr.mxu0 0.0
        %1031 = vmatpush1.xpose.msra.mxu0 0.0
        %1032 = vmatprep.subr.mxu0 0.0
        %1033 = vmatpush1.xpose.msra.mxu0 0.0
        %1034 = vmatprep.subr.mxu0 0.0
        %1035 = vmatpush1.xpose.msra.mxu0 0.0
        %1036 = vmatprep.subr.mxu0 0.0
        %1037 = vmatpush1.xpose.msra.mxu0 0.0
        %1038 = vmatprep.subr.mxu0 0.0
        %1039 = vmatpush1.xpose.msra.mxu0 0.0
        %1040 = vmatprep.subr.mxu0 0.0
        %1041 = vmatpush1.xpose.msra.mxu0 0.0
        %1042 = vmatprep.subr.mxu0 0.0
        %1043 = vmatpush1.xpose.msra.mxu0 0.0
        %1044 = vmatprep.subr.mxu0 0.0
        %1045 = vmatpush1.xpose.msra.mxu0 0.0
        %1046 = vmatprep.subr.mxu0 0.0
        %1047 = vmatpush1.xpose.msra.mxu0 0.0
        %1048 = vmatprep.subr.mxu0 0.0
        %1049 = vmatpush1.xpose.msra.mxu0 0.0
        %1050 = vmatprep.subr.mxu0 0.0
        %1051 = vmatpush1.xpose.msra.mxu0 %v1018
        %1052 = vmatprep.subr.mxu0 0.0
        %1053 = vmatpush2.xpose.msra.mxu0 0.0
        %1054 = vmatprep.subr.mxu0 0.0
        %1055 = vmatpush2.xpose.msra.mxu0 0.0
        %1056 = vmatprep.subr.mxu0 0.0
        %1057 = vmatpush2.xpose.msra.mxu0 0.0
        %1058 = vmatprep.subr.mxu0 0.0
        %1059 = vmatpush2.xpose.msra.mxu0 0.0
        %1060 = vmatprep.subr.mxu0 0.0
        %1061 = vmatpush2.xpose.msra.mxu0 0.0
        %1062 = vmatprep.subr.mxu0 0.0
        %1063 = vmatpush2.xpose.msra.mxu0 0.0
        %1064 = vmatprep.subr.mxu0 0.0
        %1065 = vmatpush2.xpose.msra.mxu0 0.0
        %1066 = vmatprep.subr.mxu0 0.0
        %1067 = vmatpush2.xpose.msra.mxu0 0.0
        %1068 = vmatprep.subr.mxu0 0.0
        %1069 = vmatpush2.xpose.msra.mxu0 0.0
        %1070 = vmatprep.subr.mxu0 0.0
        %1071 = vmatpush2.xpose.msra.mxu0 0.0
        %1072 = vmatprep.subr.mxu0 0.0
        %1073 = vmatpush2.xpose.msra.mxu0 0.0
        %1074 = vmatprep.subr.mxu0 0.0
        %1075 = vmatpush2.xpose.msra.mxu0 0.0
        %1076 = vmatprep.subr.mxu0 0.0
        %1077 = vmatpush2.xpose.msra.mxu0 0.0
        %1078 = vmatprep.subr.mxu0 0.0
        %1079 = vmatpush2.xpose.msra.mxu0 0.0
        %1080 = vmatprep.subr.mxu0 0.0
        %1081 = vmatpush2.xpose.msra.mxu0 0.0
        %1082 = vmatprep.subr.mxu0 0.0
        %1083 = vmatpush2.xpose.msra.mxu0 0.0
        %1084 = vmatprep.mubr.f32.mxu0 0.0
        %1085 = vmatmul.mubr.f32.gmra.mxu0 %v1016
        %v1086 = vpop.f32.mrf.mxu0
        %v1087 = vadd.f32 %v679, %v1086
        %v1088 = vpop.f32.mrf.mxu0
        %1089 = vdwg.mxu0
        %v1090 = vsel %vm759, %v1087, -inf
        %1091 = vmax.xlane.f32.xlu0 %v1090
        %v1092 = vpop.xlane.xlu0 %1091
        %v1093 = vsub.f32 %v1087, %v1092
        %v1094 = vmul.f32 %v1093, 1.442695
        %v1095 = vpow.pop %v1094
        %v1096 = vsel %vm759, %v1095, 0.0
        %1097 = vadd.xlane.f32.xlu0 %v1096
        %v1098 = vpop.xlane.xlu0 %1097
        %1099 = vrot.lane.b32.xlu0 %v618, 16
        %v1100 = vpop.permute.xlu0 %1099
        %v1103 = vsel %vm759, %v1095, 0
        %1105 = vmatprep.subr.mxu0 0.0
        %1106 = vmatpush1.msra.mxu0 0.0
        %1107 = vmatprep.subr.mxu0 0.0
        %1108 = vmatpush1.msra.mxu0 0.0
        %1109 = vmatprep.subr.mxu0 0.0
        %1110 = vmatpush1.msra.mxu0 0.0
        %1111 = vmatprep.subr.mxu0 0.0
        %1112 = vmatpush1.msra.mxu0 0.0
        %1113 = vmatprep.subr.mxu0 0.0
        %1114 = vmatpush1.msra.mxu0 0.0
        %1115 = vmatprep.subr.mxu0 0.0
        %1116 = vmatpush1.msra.mxu0 0.0
        %1117 = vmatprep.subr.mxu0 0.0
        %1118 = vmatpush1.msra.mxu0 0.0
        %1119 = vmatprep.subr.mxu0 0.0
        %1120 = vmatpush1.msra.mxu0 0.0
        %1121 = vmatprep.subr.mxu0 0.0
        %1122 = vmatpush1.msra.mxu0 0.0
        %1123 = vmatprep.subr.mxu0 0.0
        %1124 = vmatpush1.msra.mxu0 0.0
        %1125 = vmatprep.subr.mxu0 0.0
        %1126 = vmatpush1.msra.mxu0 0.0
        %1127 = vmatprep.subr.mxu0 0.0
        %1128 = vmatpush1.msra.mxu0 0.0
        %1129 = vmatprep.subr.mxu0 0.0
        %1130 = vmatpush1.msra.mxu0 0.0
        %1131 = vmatprep.subr.mxu0 0.0
        %1132 = vmatpush1.msra.mxu0 0.0
        %1133 = vmatprep.subr.mxu0 0.0
        %1134 = vmatpush1.msra.mxu0 0.0
        %1135 = vmatprep.subr.mxu0 0.0
        %1136 = vmatpush1.msra.mxu0 %v1100
        %1137 = vmatprep.subr.mxu0 0.0
        %1138 = vmatpush2.msra.mxu0 0.0
        %1139 = vmatprep.subr.mxu0 0.0
        %1140 = vmatpush2.msra.mxu0 0.0
        %1141 = vmatprep.subr.mxu0 0.0
        %1142 = vmatpush2.msra.mxu0 0.0
        %1143 = vmatprep.subr.mxu0 0.0
        %1144 = vmatpush2.msra.mxu0 0.0
        %1145 = vmatprep.subr.mxu0 0.0
        %1146 = vmatpush2.msra.mxu0 0.0
        %1147 = vmatprep.subr.mxu0 0.0
        %1148 = vmatpush2.msra.mxu0 0.0
        %1149 = vmatprep.subr.mxu0 0.0
        %1150 = vmatpush2.msra.mxu0 0.0
        %1151 = vmatprep.subr.mxu0 0.0
        %1152 = vmatpush2.msra.mxu0 0.0
        %1153 = vmatprep.subr.mxu0 0.0
        %1154 = vmatpush2.msra.mxu0 0.0
        %1155 = vmatprep.subr.mxu0 0.0
        %1156 = vmatpush2.msra.mxu0 0.0
        %1157 = vmatprep.subr.mxu0 0.0
        %1158 = vmatpush2.msra.mxu0 0.0
        %1159 = vmatprep.subr.mxu0 0.0
        %1160 = vmatpush2.msra.mxu0 0.0
        %1161 = vmatprep.subr.mxu0 0.0
        %1162 = vmatpush2.msra.mxu0 0.0
        %1163 = vmatprep.subr.mxu0 0.0
        %1164 = vmatpush2.msra.mxu0 0.0
        %1165 = vmatprep.subr.mxu0 0.0
        %1166 = vmatpush2.msra.mxu0 0.0
        %1167 = vmatprep.subr.mxu0 0.0
        %1168 = vmatpush2.msra.mxu0 0.0
        %1169 = vmatprep.mubr.f32.mxu0 0.0
        %1170 = vmatmul.mubr.f32.gmra.mxu0 %v1103
        %v1171 = vpop.f32.mrf.mxu0
        %v1172 = vadd.f32 0.0, %v1171
        %v1173 = vpop.f32.mrf.mxu0
        %1174 = vdwg.mxu0
        %v1175 = vrcp.pop %v1098
        %v1176 = vmul.f32 %v1172, %v1175
        %1178 = vrot.lane.b32.xlu0 %v1176, 32
        %v1179 = vpop.permute.xlu0 %1178
        %vm1181 = vcmask 392448
        %1182 = vst.msk [vmem:[#allocation3] sm:$0xff] %vm1181, %v1179
        %1183 = vrot.lane.b32.xlu0 %v647, 80
        %v1184 = vpop.permute.xlu0 %1183
        %v1185 = vsel %vm683, %v1184, 0
        %1187 = vmatprep.subr.mxu0 0.0
        %1188 = vmatpush1.xpose.msra.mxu0 0.0
        %1189 = vmatprep.subr.mxu0 0.0
        %1190 = vmatpush1.xpose.msra.mxu0 0.0
        %1191 = vmatprep.subr.mxu0 0.0
        %1192 = vmatpush1.xpose.msra.mxu0 0.0
        %1193 = vmatprep.subr.mxu0 0.0
        %1194 = vmatpush1.xpose.msra.mxu0 0.0
        %1195 = vmatprep.subr.mxu0 0.0
        %1196 = vmatpush1.xpose.msra.mxu0 0.0
        %1197 = vmatprep.subr.mxu0 0.0
        %1198 = vmatpush1.xpose.msra.mxu0 0.0
        %1199 = vmatprep.subr.mxu0 0.0
        %1200 = vmatpush1.xpose.msra.mxu0 0.0
        %1201 = vmatprep.subr.mxu0 0.0
        %1202 = vmatpush1.xpose.msra.mxu0 0.0
        %1203 = vmatprep.subr.mxu0 0.0
        %1204 = vmatpush1.xpose.msra.mxu0 0.0
        %1205 = vmatprep.subr.mxu0 0.0
        %1206 = vmatpush1.xpose.msra.mxu0 0.0
        %1207 = vmatprep.subr.mxu0 0.0
        %1208 = vmatpush1.xpose.msra.mxu0 0.0
        %1209 = vmatprep.subr.mxu0 0.0
        %1210 = vmatpush1.xpose.msra.mxu0 0.0
        %1211 = vmatprep.subr.mxu0 0.0
        %1212 = vmatpush1.xpose.msra.mxu0 0.0
        %1213 = vmatprep.subr.mxu0 0.0
        %1214 = vmatpush1.xpose.msra.mxu0 0.0
        %1215 = vmatprep.subr.mxu0 0.0
        %1216 = vmatpush1.xpose.msra.mxu0 0.0
        %1217 = vmatprep.subr.mxu0 0.0
        %1218 = vmatpush1.xpose.msra.mxu0 %v1018
        %1219 = vmatprep.subr.mxu0 0.0
        %1220 = vmatpush2.xpose.msra.mxu0 0.0
        %1221 = vmatprep.subr.mxu0 0.0
        %1222 = vmatpush2.xpose.msra.mxu0 0.0
        %1223 = vmatprep.subr.mxu0 0.0
        %1224 = vmatpush2.xpose.msra.mxu0 0.0
        %1225 = vmatprep.subr.mxu0 0.0
        %1226 = vmatpush2.xpose.msra.mxu0 0.0
        %1227 = vmatprep.subr.mxu0 0.0
        %1228 = vmatpush2.xpose.msra.mxu0 0.0
        %1229 = vmatprep.subr.mxu0 0.0
        %1230 = vmatpush2.xpose.msra.mxu0 0.0
        %1231 = vmatprep.subr.mxu0 0.0
        %1232 = vmatpush2.xpose.msra.mxu0 0.0
        %1233 = vmatprep.subr.mxu0 0.0
        %1234 = vmatpush2.xpose.msra.mxu0 0.0
        %1235 = vmatprep.subr.mxu0 0.0
        %1236 = vmatpush2.xpose.msra.mxu0 0.0
        %1237 = vmatprep.subr.mxu0 0.0
        %1238 = vmatpush2.xpose.msra.mxu0 0.0
        %1239 = vmatprep.subr.mxu0 0.0
        %1240 = vmatpush2.xpose.msra.mxu0 0.0
        %1241 = vmatprep.subr.mxu0 0.0
        %1242 = vmatpush2.xpose.msra.mxu0 0.0
        %1243 = vmatprep.subr.mxu0 0.0
        %1244 = vmatpush2.xpose.msra.mxu0 0.0
        %1245 = vmatprep.subr.mxu0 0.0
        %1246 = vmatpush2.xpose.msra.mxu0 0.0
        %1247 = vmatprep.subr.mxu0 0.0
        %1248 = vmatpush2.xpose.msra.mxu0 0.0
        %1249 = vmatprep.subr.mxu0 0.0
        %1250 = vmatpush2.xpose.msra.mxu0 0.0
        %1251 = vmatprep.mubr.f32.mxu0 0.0
        %1252 = vmatmul.mubr.f32.gmra.mxu0 %v1185
        %v1253 = vpop.f32.mrf.mxu0
        %v1254 = vadd.f32 %v679, %v1253
        %v1255 = vpop.f32.mrf.mxu0
        %1256 = vdwg.mxu0
        %v1257 = vsel %vm759, %v1254, -inf
        %1258 = vmax.xlane.f32.xlu0 %v1257
        %v1259 = vpop.xlane.xlu0 %1258
        %v1260 = vsub.f32 %v1254, %v1259
        %v1261 = vmul.f32 %v1260, 1.442695
        %v1262 = vpow.pop %v1261
        %v1263 = vsel %vm759, %v1262, 0.0
        %1264 = vadd.xlane.f32.xlu0 %v1263
        %v1265 = vpop.xlane.xlu0 %1264
        %v1267 = vsel %vm759, %v1262, 0
        %1269 = vmatprep.subr.mxu0 0.0
        %1270 = vmatpush1.msra.mxu0 0.0
        %1271 = vmatprep.subr.mxu0 0.0
        %1272 = vmatpush1.msra.mxu0 0.0
        %1273 = vmatprep.subr.mxu0 0.0
        %1274 = vmatpush1.msra.mxu0 0.0
        %1275 = vmatprep.subr.mxu0 0.0
        %1276 = vmatpush1.msra.mxu0 0.0
        %1277 = vmatprep.subr.mxu0 0.0
        %1278 = vmatpush1.msra.mxu0 0.0
        %1279 = vmatprep.subr.mxu0 0.0
        %1280 = vmatpush1.msra.mxu0 0.0
        %1281 = vmatprep.subr.mxu0 0.0
        %1282 = vmatpush1.msra.mxu0 0.0
        %1283 = vmatprep.subr.mxu0 0.0
        %1284 = vmatpush1.msra.mxu0 0.0
        %1285 = vmatprep.subr.mxu0 0.0
        %1286 = vmatpush1.msra.mxu0 0.0
        %1287 = vmatprep.subr.mxu0 0.0
        %1288 = vmatpush1.msra.mxu0 0.0
        %1289 = vmatprep.subr.mxu0 0.0
        %1290 = vmatpush1.msra.mxu0 0.0
        %1291 = vmatprep.subr.mxu0 0.0
        %1292 = vmatpush1.msra.mxu0 0.0
        %1293 = vmatprep.subr.mxu0 0.0
        %1294 = vmatpush1.msra.mxu0 0.0
        %1295 = vmatprep.subr.mxu0 0.0
        %1296 = vmatpush1.msra.mxu0 0.0
        %1297 = vmatprep.subr.mxu0 0.0
        %1298 = vmatpush1.msra.mxu0 0.0
        %1299 = vmatprep.subr.mxu0 0.0
        %1300 = vmatpush1.msra.mxu0 %v1100
        %1301 = vmatprep.subr.mxu0 0.0
        %1302 = vmatpush2.msra.mxu0 0.0
        %1303 = vmatprep.subr.mxu0 0.0
        %1304 = vmatpush2.msra.mxu0 0.0
        %1305 = vmatprep.subr.mxu0 0.0
        %1306 = vmatpush2.msra.mxu0 0.0
        %1307 = vmatprep.subr.mxu0 0.0
        %1308 = vmatpush2.msra.mxu0 0.0
        %1309 = vmatprep.subr.mxu0 0.0
        %1310 = vmatpush2.msra.mxu0 0.0
        %1311 = vmatprep.subr.mxu0 0.0
        %1312 = vmatpush2.msra.mxu0 0.0
        %1313 = vmatprep.subr.mxu0 0.0
        %1314 = vmatpush2.msra.mxu0 0.0
        %1315 = vmatprep.subr.mxu0 0.0
        %1316 = vmatpush2.msra.mxu0 0.0
        %1317 = vmatprep.subr.mxu0 0.0
        %1318 = vmatpush2.msra.mxu0 0.0
        %1319 = vmatprep.subr.mxu0 0.0
        %1320 = vmatpush2.msra.mxu0 0.0
        %1321 = vmatprep.subr.mxu0 0.0
        %1322 = vmatpush2.msra.mxu0 0.0
        %1323 = vmatprep.subr.mxu0 0.0
        %1324 = vmatpush2.msra.mxu0 0.0
        %1325 = vmatprep.subr.mxu0 0.0
        %1326 = vmatpush2.msra.mxu0 0.0
        %1327 = vmatprep.subr.mxu0 0.0
        %1328 = vmatpush2.msra.mxu0 0.0
        %1329 = vmatprep.subr.mxu0 0.0
        %1330 = vmatpush2.msra.mxu0 0.0
        %1331 = vmatprep.subr.mxu0 0.0
        %1332 = vmatpush2.msra.mxu0 0.0
        %1333 = vmatprep.mubr.f32.mxu0 0.0
        %1334 = vmatmul.mubr.f32.gmra.mxu0 %v1267
        %v1335 = vpop.f32.mrf.mxu0
        %v1336 = vadd.f32 0.0, %v1335
        %v1337 = vpop.f32.mrf.mxu0
        %1338 = vdwg.mxu0
        %v1339 = vrcp.pop %v1265
        %v1340 = vmul.f32 %v1336, %v1339
        %1342 = vrot.lane.b32.xlu0 %v1340, 48
        %v1343 = vpop.permute.xlu0 %1342
        %vm1345 = vcmask 523648
        %1346 = vst.msk [vmem:[#allocation3] sm:$0xff] %vm1345, %v1343
        %v1347 = vld [vmem:[#allocation3] sm:$0xff]
        %v1348 = vpack.c.bf16 %v1347, %v1347
        %v1349 = vld [vmem:[%s506] sm:$0xf]
        %v1350 = vld [vmem:[%s506 + $0x4] sm:$0xf]
        %v1351 = vld [vmem:[%s506 + $0x8] sm:$0xf]
        %v1352 = vld [vmem:[%s506 + $0xc] sm:$0xf]
        %v1353 = vld [vmem:[%s506 + $0x10] sm:$0xf]
        %v1354 = vld [vmem:[%s506 + $0x14] sm:$0xf]
        %v1355 = vld [vmem:[%s506 + $0x18] sm:$0xf]
        %v1356 = vld [vmem:[%s506 + $0x1c] sm:$0xf]
        %v1365 = vunpack.c.l.b16 %v1349
        %v1366 = vunpack.c.l.b16 %v1350
        %v1367 = vunpack.c.l.b16 %v1351
        %v1368 = vunpack.c.l.b16 %v1352
        %v1369 = vunpack.c.l.b16 %v1353
        %v1370 = vunpack.c.l.b16 %v1354
        %v1371 = vunpack.c.l.b16 %v1355
        %v1372 = vunpack.c.l.b16 %v1356
        %v1373 = vpack.c.b16 %v1366, %v1365
        %v1374 = vpack.c.b16 %v1368, %v1367
        %v1375 = vpack.c.b16 %v1370, %v1369
        %v1376 = vpack.c.b16 %v1372, %v1371
        %v1382 = vsel %vm531, %v1348, 0
        %1384 = vmatprep.subr.bf16.mxu0 0
        %1385 = vmatpush1.bf16.msra.mxu0 0
        %1386 = vmatprep.subr.bf16.mxu0 0
        %1387 = vmatpush1.bf16.msra.mxu0 0
        %1388 = vmatprep.subr.bf16.mxu0 0
        %1389 = vmatpush1.bf16.msra.mxu0 0
        %1390 = vmatprep.subr.bf16.mxu0 0
        %1391 = vmatpush1.bf16.msra.mxu0 0
        %1392 = vmatprep.subr.bf16.mxu0 0
        %1393 = vmatpush1.bf16.msra.mxu0 %v1376
        %1394 = vmatprep.subr.bf16.mxu0 0
        %1395 = vmatpush1.bf16.msra.mxu0 %v1375
        %1396 = vmatprep.subr.bf16.mxu0 0
        %1397 = vmatpush1.bf16.msra.mxu0 %v1374
        %1398 = vmatprep.subr.bf16.mxu0 0
        %1399 = vmatpush1.bf16.msra.mxu0 %v1373
        %1400 = vmatprep.subr.bf16.mxu0 0
        %1401 = vmatpush2.bf16.msra.mxu0 0
        %1402 = vmatprep.subr.bf16.mxu0 0
        %1403 = vmatpush2.bf16.msra.mxu0 0
        %1404 = vmatprep.subr.bf16.mxu0 0
        %1405 = vmatpush2.bf16.msra.mxu0 0
        %1406 = vmatprep.subr.bf16.mxu0 0
        %1407 = vmatpush2.bf16.msra.mxu0 0
        %1408 = vmatprep.subr.bf16.mxu0 0
        %1409 = vmatpush2.bf16.msra.mxu0 0
        %1410 = vmatprep.subr.bf16.mxu0 0
        %1411 = vmatpush2.bf16.msra.mxu0 0
        %1412 = vmatprep.subr.bf16.mxu0 0
        %1413 = vmatpush2.bf16.msra.mxu0 0
        %1414 = vmatprep.subr.bf16.mxu0 0
        %1415 = vmatpush2.bf16.msra.mxu0 0
        %1416 = vmatprep.mubr.bf16.mxu0 0
        %1417 = vmatmul.mubr.bf16.gmra.mxu0 %v1382
        %v1418 = vpop.f32.mrf.mxu0
        %v1419 = vadd.f32 0.0, %v1418
        %v1420 = vpop.f32.mrf.mxu0
        %v1421 = vpop.f32.mrf.mxu0
        %v1422 = vpop.f32.mrf.mxu0
        %1423 = vdwg.mxu0
        %v1424 = vadd.f32 %v528, %v1419
        %v1425 = vld [vmem:[%s509] sm:$0x1]
        %v1426 = vmul.f32 %v1424, %v1424
        %v1427 = vsel %vm531, %v1426, 0.0
        %1428 = vadd.xlane.f32.xlu0 %v1427
        %v1429 = vpop.xlane.xlu0 %1428
        %v1430 = vmul.f32 %v1429, %v535
        %v1431 = vadd.f32 %v1430, 1e-06
        %v1432 = vrsqrt.pop %v1431
        %v1433 = vmul.f32 %v1424, %v1432
        %v1435 = vlaneseq
        %v1436 = vshrl.u32 %v1435, 7
        %v1437 = vsub.s32 0, %v1436
        %v1438 = vrot.slane %v1425, %v1437
        %v1440 = vmul.f32 %v1433, %v1438
        %v1441 = vpack.c.bf16 %v1440, %v1440
        %v1442 = vld [vmem:[%s514] sm:$0xff]
        %v1443 = vld [vmem:[%s514 + $0x8] sm:$0xf]
        %v1444 = vld [vmem:[%s514 + $0xc] sm:$0xff]
        %v1445 = vld [vmem:[%s514 + $0x14] sm:$0xf]
        %v1446 = vld [vmem:[%s514 + $0x18] sm:$0xff]
        %v1447 = vld [vmem:[%s514 + $0x20] sm:$0xf]
        %v1448 = vld [vmem:[%s514 + $0x24] sm:$0xff]
        %v1449 = vld [vmem:[%s514 + $0x2c] sm:$0xf]
        %v1450 = vld [vmem:[%s514 + $0x30] sm:$0xff]
        %v1451 = vld [vmem:[%s514 + $0x38] sm:$0xf]
        %v1452 = vld [vmem:[%s514 + $0x3c] sm:$0xff]
        %v1453 = vld [vmem:[%s514 + $0x44] sm:$0xf]
        %v1454 = vld [vmem:[%s514 + $0x48] sm:$0xff]
        %v1455 = vld [vmem:[%s514 + $0x50] sm:$0xf]
        %v1456 = vld [vmem:[%s514 + $0x54] sm:$0xff]
        %v1457 = vld [vmem:[%s514 + $0x5c] sm:$0xf]
        %v1474 = vunpack.c.l.b16 %v1442
        %v1475 = vunpack.c.h.b16 %v1442
        %v1476 = vunpack.c.l.b16 %v1443
        %v1477 = vunpack.c.l.b16 %v1444
        %v1478 = vunpack.c.h.b16 %v1444
        %v1479 = vunpack.c.l.b16 %v1445
        %v1480 = vunpack.c.l.b16 %v1446
        %v1481 = vunpack.c.h.b16 %v1446
        %v1482 = vunpack.c.l.b16 %v1447
        %v1483 = vunpack.c.l.b16 %v1448
        %v1484 = vunpack.c.h.b16 %v1448
        %v1485 = vunpack.c.l.b16 %v1449
        %v1486 = vunpack.c.l.b16 %v1450
        %v1487 = vunpack.c.h.b16 %v1450
        %v1488 = vunpack.c.l.b16 %v1451
        %v1489 = vunpack.c.l.b16 %v1452
        %v1490 = vunpack.c.h.b16 %v1452
        %v1491 = vunpack.c.l.b16 %v1453
        %v1492 = vunpack.c.l.b16 %v1454
        %v1493 = vunpack.c.h.b16 %v1454
        %v1494 = vunpack.c.l.b16 %v1455
        %v1495 = vunpack.c.l.b16 %v1456
        %v1496 = vunpack.c.h.b16 %v1456
        %v1497 = vunpack.c.l.b16 %v1457
        %v1498 = vpack.c.b16 %v1477, %v1474
        %v1499 = vpack.c.b16 %v1478, %v1475
        %v1500 = vpack.c.b16 %v1479, %v1476
        %v1501 = vpack.c.b16 %v1483, %v1480
        %v1502 = vpack.c.b16 %v1484, %v1481
        %v1503 = vpack.c.b16 %v1485, %v1482
        %v1504 = vpack.c.b16 %v1489, %v1486
        %v1505 = vpack.c.b16 %v1490, %v1487
        %v1506 = vpack.c.b16 %v1491, %v1488
        %v1507 = vpack.c.b16 %v1495, %v1492
        %v1508 = vpack.c.b16 %v1496, %v1493
        %v1509 = vpack.c.b16 %v1497, %v1494
        %v1523 = vsel %vm531, %v1441, 0
        %1525 = vmatprep.subr.bf16.mxu0 0
        %1526 = vmatpush1.bf16.msra.mxu0 0
        %1527 = vmatprep.subr.bf16.mxu0 0
        %1528 = vmatpush1.bf16.msra.mxu0 0
        %1529 = vmatprep.subr.bf16.mxu0 0
        %1530 = vmatpush1.bf16.msra.mxu0 0
        %1531 = vmatprep.subr.bf16.mxu0 0
        %1532 = vmatpush1.bf16.msra.mxu0 0
        %1533 = vmatprep.subr.bf16.mxu0 %v1508
        %1534 = vmatpush1.bf16.msra.mxu0 %v1507
        %1535 = vmatprep.subr.bf16.mxu0 %v1505
        %1536 = vmatpush1.bf16.msra.mxu0 %v1504
        %1537 = vmatprep.subr.bf16.mxu0 %v1502
        %1538 = vmatpush1.bf16.msra.mxu0 %v1501
        %1539 = vmatprep.subr.bf16.mxu0 %v1499
        %1540 = vmatpush1.bf16.msra.mxu0 %v1498
        %1541 = vmatprep.subr.bf16.mxu0 0
        %1542 = vmatpush2.bf16.msra.mxu0 0
        %1543 = vmatprep.subr.bf16.mxu0 0
        %1544 = vmatpush2.bf16.msra.mxu0 0
        %1545 = vmatprep.subr.bf16.mxu0 0
        %1546 = vmatpush2.bf16.msra.mxu0 0
        %1547 = vmatprep.subr.bf16.mxu0 0
        %1548 = vmatpush2.bf16.msra.mxu0 0
        %1549 = vmatprep.subr.bf16.mxu0 0
        %1550 = vmatpush2.bf16.msra.mxu0 0
        %1551 = vmatprep.subr.bf16.mxu0 0
        %1552 = vmatpush2.bf16.msra.mxu0 0
        %1553 = vmatprep.subr.bf16.mxu0 0
        %1554 = vmatpush2.bf16.msra.mxu0 0
        %1555 = vmatprep.subr.bf16.mxu0 0
        %1556 = vmatpush2.bf16.msra.mxu0 0
        %1557 = vmatprep.mubr.bf16.mxu0 0
        %1558 = vmatmul.mubr.bf16.gmra.mxu0 %v1523
        %v1559 = vpop.f32.mrf.mxu0
        %v1560 = vadd.f32 0.0, %v1559
        %v1561 = vpop.f32.mrf.mxu0
        %v1562 = vadd.f32 0.0, %v1561
        %v1563 = vpop.f32.mrf.mxu0
        %v1564 = vpop.f32.mrf.mxu0
        %1565 = vdwg.mxu0
        %1566 = vmatprep.subr.bf16.mxu0 0
        %1567 = vmatpush1.bf16.msra.mxu0 0
        %1568 = vmatprep.subr.bf16.mxu0 0
        %1569 = vmatpush1.bf16.msra.mxu0 0
        %1570 = vmatprep.subr.bf16.mxu0 0
        %1571 = vmatpush1.bf16.msra.mxu0 0
        %1572 = vmatprep.subr.bf16.mxu0 0
        %1573 = vmatpush1.bf16.msra.mxu0 0
        %1574 = vmatprep.subr.bf16.mxu0 0
        %1575 = vmatpush1.bf16.msra.mxu0 %v1509
        %1576 = vmatprep.subr.bf16.mxu0 0
        %1577 = vmatpush1.bf16.msra.mxu0 %v1506
        %1578 = vmatprep.subr.bf16.mxu0 0
        %1579 = vmatpush1.bf16.msra.mxu0 %v1503
        %1580 = vmatprep.subr.bf16.mxu0 0
        %1581 = vmatpush1.bf16.msra.mxu0 %v1500
        %1582 = vmatprep.subr.bf16.mxu0 0
        %1583 = vmatpush2.bf16.msra.mxu0 0
        %1584 = vmatprep.subr.bf16.mxu0 0
        %1585 = vmatpush2.bf16.msra.mxu0 0
        %1586 = vmatprep.subr.bf16.mxu0 0
        %1587 = vmatpush2.bf16.msra.mxu0 0
        %1588 = vmatprep.subr.bf16.mxu0 0
        %1589 = vmatpush2.bf16.msra.mxu0 0
        %1590 = vmatprep.subr.bf16.mxu0 0
        %1591 = vmatpush2.bf16.msra.mxu0 0
        %1592 = vmatprep.subr.bf16.mxu0 0
        %1593 = vmatpush2.bf16.msra.mxu0 0
        %1594 = vmatprep.subr.bf16.mxu0 0
        %1595 = vmatpush2.bf16.msra.mxu0 0
        %1596 = vmatprep.subr.bf16.mxu0 0
        %1597 = vmatpush2.bf16.msra.mxu0 0
        %1598 = vmatprep.mubr.bf16.mxu0 0
        %1599 = vmatmul.mubr.bf16.gmra.mxu0 %v1523
        %v1600 = vpop.f32.mrf.mxu0
        %v1601 = vadd.f32 0.0, %v1600
        %v1602 = vpop.f32.mrf.mxu0
        %v1603 = vpop.f32.mrf.mxu0
        %v1604 = vpop.f32.mrf.mxu0
        %1605 = vdwg.mxu0
        %v1606 = vsub.f32 0.0, %v1560
        %v1607 = vsub.f32 0.0, %v1562
        %v1608 = vmul.f32 %v1606, 1.442695
        %v1609 = vpow.pop %v1608
        %v1610 = vmul.f32 %v1607, 1.442695
        %v1611 = vpow.pop %v1610
        %v1612 = vadd.f32 %v1609, 1.0
        %v1613 = vadd.f32 %v1611, 1.0
        %v1614 = vrcp.pop %v1612
        %v1615 = vrcp.pop %v1613
        %v1616 = vmul.f32 %v1560, %v1614
        %v1617 = vmul.f32 %v1562, %v1615
        %1620 = vrot.lane.b32.xlu0 %v1562, 64
        %v1621 = vpop.permute.xlu0 %1620
        %1622 = vrot.lane.b32.xlu0 %v1601, 64
        %v1623 = vpop.permute.xlu0 %1622
        %v1624 = vsel %vm531, %v1621, %v1623
        %v1627 = vmul.f32 %v1616, %v1624
        %v1628 = vmul.f32 %v1617, %v1623
        %v1629 = vpack.c.bf16 %v1627, %v1627
        %v1630 = vpack.c.bf16 %v1628, %v1628
        %v1631 = vld [vmem:[%s519] sm:$0xf]
        %v1632 = vld [vmem:[%s519 + $0x4] sm:$0xf]
        %v1633 = vld [vmem:[%s519 + $0x8] sm:$0xf]
        %v1634 = vld [vmem:[%s519 + $0xc] sm:$0xf]
        %v1635 = vld [vmem:[%s519 + $0x10] sm:$0xf]
        %v1636 = vld [vmem:[%s519 + $0x14] sm:$0xf]
        %v1637 = vld [vmem:[%s519 + $0x18] sm:$0xf]
        %v1638 = vld [vmem:[%s519 + $0x1c] sm:$0xf]
        %v1639 = vld [vmem:[%s519 + $0x20] sm:$0xf]
        %v1640 = vld [vmem:[%s519 + $0x24] sm:$0xf]
        %v1641 = vld [vmem:[%s519 + $0x28] sm:$0xf]
        %v1642 = vld [vmem:[%s519 + $0x2c] sm:$0xf]
        %v1643 = vld [vmem:[%s519 + $0x30] sm:$0xf]
        %v1644 = vld [vmem:[%s519 + $0x34] sm:$0xf]
        %v1645 = vld [vmem:[%s519 + $0x38] sm:$0xf]
        %v1646 = vld [vmem:[%s519 + $0x3c] sm:$0xf]
        %v1647 = vld [vmem:[%s519 + $0x40] sm:$0xf]
        %v1648 = vld [vmem:[%s519 + $0x44] sm:$0xf]
        %v1649 = vld [vmem:[%s519 + $0x48] sm:$0xf]
        %v1650 = vld [vmem:[%s519 + $0x4c] sm:$0xf]
        %v1651 = vld [vmem:[%s519 + $0x50] sm:$0xf]
        %v1652 = vld [vmem:[%s519 + $0x54] sm:$0xf]
        %v1653 = vld [vmem:[%s519 + $0x58] sm:$0xf]
        %v1654 = vld [vmem:[%s519 + $0x5c] sm:$0xf]
        %v1679 = vunpack.c.l.b16 %v1631
        %v1680 = vunpack.c.l.b16 %v1632
        %v1681 = vunpack.c.l.b16 %v1633
        %v1682 = vunpack.c.l.b16 %v1634
        %v1683 = vunpack.c.l.b16 %v1635
        %v1684 = vunpack.c.l.b16 %v1636
        %v1685 = vunpack.c.l.b16 %v1637
        %v1686 = vunpack.c.l.b16 %v1638
        %v1687 = vunpack.c.l.b16 %v1639
        %v1688 = vunpack.c.l.b16 %v1640
        %v1689 = vunpack.c.l.b16 %v1641
        %v1690 = vunpack.c.l.b16 %v1642
        %v1691 = vunpack.c.l.b16 %v1643
        %v1692 = vunpack.c.l.b16 %v1644
        %v1693 = vunpack.c.l.b16 %v1645
        %v1694 = vunpack.c.l.b16 %v1646
        %v1695 = vunpack.c.l.b16 %v1647
        %v1696 = vunpack.c.l.b16 %v1648
        %v1697 = vunpack.c.l.b16 %v1649
        %v1698 = vunpack.c.l.b16 %v1650
        %v1699 = vunpack.c.l.b16 %v1651
        %v1700 = vunpack.c.l.b16 %v1652
        %v1701 = vunpack.c.l.b16 %v1653
        %v1702 = vunpack.c.l.b16 %v1654
        %v1703 = vpack.c.b16 %v1680, %v1679
        %v1704 = vpack.c.b16 %v1682, %v1681
        %v1705 = vpack.c.b16 %v1684, %v1683
        %v1706 = vpack.c.b16 %v1686, %v1685
        %v1707 = vpack.c.b16 %v1688, %v1687
        %v1708 = vpack.c.b16 %v1690, %v1689
        %v1709 = vpack.c.b16 %v1692, %v1691
        %v1710 = vpack.c.b16 %v1694, %v1693
        %v1711 = vpack.c.b16 %v1696, %v1695
        %v1712 = vpack.c.b16 %v1698, %v1697
        %v1713 = vpack.c.b16 %v1700, %v1699
        %v1714 = vpack.c.b16 %v1702, %v1701
        %v1728 = vsel %vm531, %v1630, 0
        %1730 = vmatprep.subr.bf16.mxu0 0
        %1731 = vmatpush1.bf16.msra.mxu0 %v1710
        %1732 = vmatprep.subr.bf16.mxu0 0
        %1733 = vmatpush1.bf16.msra.mxu0 %v1709
        %1734 = vmatprep.subr.bf16.mxu0 0
        %1735 = vmatpush1.bf16.msra.mxu0 %v1708
        %1736 = vmatprep.subr.bf16.mxu0 0
        %1737 = vmatpush1.bf16.msra.mxu0 %v1707
        %1738 = vmatprep.subr.bf16.mxu0 0
        %1739 = vmatpush1.bf16.msra.mxu0 %v1706
        %1740 = vmatprep.subr.bf16.mxu0 0
        %1741 = vmatpush1.bf16.msra.mxu0 %v1705
        %1742 = vmatprep.subr.bf16.mxu0 0
        %1743 = vmatpush1.bf16.msra.mxu0 %v1704
        %1744 = vmatprep.subr.bf16.mxu0 0
        %1745 = vmatpush1.bf16.msra.mxu0 %v1703
        %1746 = vmatprep.subr.bf16.mxu0 0
        %1747 = vmatpush2.bf16.msra.mxu0 0
        %1748 = vmatprep.subr.bf16.mxu0 0
        %1749 = vmatpush2.bf16.msra.mxu0 0
        %1750 = vmatprep.subr.bf16.mxu0 0
        %1751 = vmatpush2.bf16.msra.mxu0 0
        %1752 = vmatprep.subr.bf16.mxu0 0
        %1753 = vmatpush2.bf16.msra.mxu0 0
        %1754 = vmatprep.subr.bf16.mxu0 0
        %1755 = vmatpush2.bf16.msra.mxu0 %v1714
        %1756 = vmatprep.subr.bf16.mxu0 0
        %1757 = vmatpush2.bf16.msra.mxu0 %v1713
        %1758 = vmatprep.subr.bf16.mxu0 0
        %1759 = vmatpush2.bf16.msra.mxu0 %v1712
        %1760 = vmatprep.subr.bf16.mxu0 0
        %1761 = vmatpush2.bf16.msra.mxu0 %v1711
        %1762 = vmatprep.mubr.bf16.mxu0 %v1728
        %1763 = vmatmul.mubr.bf16.gmra.mxu0 %v1629
        %v1764 = vpop.f32.mrf.mxu0
        %v1765 = vadd.f32 0.0, %v1764
        %v1766 = vpop.f32.mrf.mxu0
        %v1767 = vpop.f32.mrf.mxu0
        %v1768 = vpop.f32.mrf.mxu0
        %1769 = vdwg.mxu0
        %v1770 = vadd.f32 %v1424, %v1765
        %1771 = vst.msk [vmem:[#allocation2] sm:$0xff] %vm531, %v1770
        %p1772 = scmp.eq.s32.totalorder %s33, 1
        // Predicated region
        $region77: #{tpu_custom_call.1} parent=59 // pred_check
          %p1773 = pneg %p1772
        $region78: #{tpu_custom_call.1} parent=59 // pred_check_branch
          %1775 = sbr.rel (%p1773) target = $region80
        $region79: #{tpu_custom_call.1} parent=59 // pred_region
          %1776 = vst.msk [vmem:[%s493] sm:$0xff] %vm531, %v1770
        $region80: #{tpu_custom_call.1} parent=59 // pred_fallthru
          _
        %s1777 = sand.u32 %s293, 1
        %s1778 = scalar_lea.sflag [#allocation6], %s1777
        %s1779 = sand.u32 %s293, 1
        %s1780 = smul.addr %s1779, 8
        %s1781 = scalar_lea.vmem [#allocation10], %s1780
        // Predicated region
        $region81: #{tpu_custom_call.1} parent=59 // pred_check
          %p1782 = pneg %p303
        $region82: #{tpu_custom_call.1} parent=59 // pred_check_branch
          %1784 = sbr.rel (%p1782) target = $region84
        $region83: #{tpu_custom_call.1} parent=59 // pred_region
          %s1786 = ssub.s32 128, 128
          %1787 = vsyncadd %s1778, %s1786
          %s1788 = smul.addr %s32, 128
          %s1789 = scalar_lea.hbm %s10, %s1788
          %s1791 = sshll.u32 %s1781, 4
          %s1792 = int_to_ptr.vmem [resolvable:$true] %s1791
          %1794 = dma.vmem_to_hbm [thread:$0]  %s1792, 128, %s1789, %s1778
        $region84: #{tpu_custom_call.1} parent=59 // pred_fallthru
          _
      $region60: #{tpu_custom_call.1} parent=5 // pred_fallthru
        _
      %p1795 = scmp.le.s32.totalorder 2, %s23
      // Predicated region
      $region85: #{tpu_custom_call.1} parent=5 // pred_check
        %p1796 = pneg %p1795
      $region86: #{tpu_custom_call.1} parent=5 // pred_check_branch
        %1798 = sbr.rel (%p1796) target = $region88
      $region87: #{tpu_custom_call.1} parent=5 // pred_region
        %s1799 = ssub.s32 %s23, 2
        // Predicated region
        $region89: #{tpu_custom_call.1} parent=87 // pred_check
          %p1800 = pneg %p309
        $region90: #{tpu_custom_call.1} parent=87 // pred_check_branch
          %1802 = sbr.rel (%p1800) target = $region92
        $region91: #{tpu_custom_call.1} parent=87 // pred_region
          %s1803 = sand.u32 %s294, 1
          %s1804 = scalar_lea.sflag [#allocation6], %s1803
          %s1805 = sand.u32 %s294, 1
          %s1806 = smul.addr %s1805, 8
          %s1807 = scalar_lea.vmem [#allocation10], %s1806
          %1808 = dma.done %s1804, 128
        $region92: #{tpu_custom_call.1} parent=87 // pred_fallthru
          _
      $region88: #{tpu_custom_call.1} parent=5 // pred_fallthru
        _
    $region6: #{tpu_custom_call.1} parent=1 // loop_footer
      %s27 = sadd.s32 1, %s23
    $region7: #{tpu_custom_call.1} parent=1 // loop_footer_branch
      %22 = sbr.rel target = $region3
    $region8: #{tpu_custom_call.1} parent=1 // loop_exit
      _
    %1809 = vsyncpa [#allocation5], 1
    %s1810 = scalar_lea.sflag [#allocation5], 1
    %1811 = vsyncpa %s1810, 1
    %1812 = vsyncpa [#allocation8], 1
    %1813 = vsyncpa [#allocation6], 1
    %s1814 = scalar_lea.sflag [#allocation6], 1
    %1815 = vsyncpa %s1814, 1

</llo_original>
